<compile_context>
chip_gen: v6e
topology: v6e:2x2x1
jax: 0.10.0
libtpu: 0.0.40
codegen_flags: <defaults>
</compile_context>

<pallas_src>
import math
import functools

import jax
import jax.numpy as jnp
from jax.experimental import pallas as pl
from jax.experimental.pallas import tpu as pltpu

_MASK_VALUE = -1e30      # finite mask -> no exp(-inf - -inf) NaN hazard once tiled


# ---------------------------------------------------------------------------
# Per-generation VMEM budget
# ---------------------------------------------------------------------------
@functools.lru_cache(maxsize=None)
def _vmem_budget_bytes():
    """~75% of physical VMEM: ~96 MiB on v5e/v6e (128 MiB), ~48 MiB on v7x (64 MiB)."""
    cap = None
    try:
        info = pltpu.get_tpu_info()
        cap = getattr(info, "vmem_capacity_bytes", None)
    except Exception:
        cap = None
    if not cap or cap <= 0:
        cap = 64 * 1024 * 1024            # conservative default (v7x per-core)
    return int(min(cap * 3 // 4, 100 * 1024 * 1024))


def _tile(dim, target):
    """Largest clean tile: `target` if it divides `dim`, else the full dim."""
    if dim <= target or dim % target != 0:
        return dim
    return target


# ---------------------------------------------------------------------------
# Projection GEMM + bias
# ---------------------------------------------------------------------------
def _matmul_bias_resident_kernel(x_ref, w_ref, b_ref, o_ref):
    # Whole weight + bias resident in VMEM; single pass over M tiles.
    acc = jnp.dot(x_ref[...], w_ref[...], preferred_element_type=jnp.float32)
    o_ref[...] = (acc + b_ref[...].astype(jnp.float32)).astype(o_ref.dtype)


def _matmul_bias_tiled_kernel(x_ref, w_ref, b_ref, o_ref, acc_ref):
    @pl.when(pl.program_id(2) == 0)
    def _init():
        # Initialize the accumulator with the broadcast bias (saves a finalize add).
        acc_ref[...] = jnp.zeros_like(acc_ref) + b_ref[...].astype(jnp.float32)

    acc_ref[...] += jnp.dot(x_ref[...], w_ref[...],
                            preferred_element_type=jnp.float32)

    @pl.when(pl.program_id(2) == pl.num_programs(2) - 1)
    def _finalize():
        o_ref[...] = acc_ref[...].astype(o_ref.dtype)


def matmul_bias(x, w, b, *, tm_target=512):
    """x: (M, K), w: (K, N), b: (1, N) -> (M, N). f32 accumulation on the MXU."""
    M, K = x.shape
    _, N = w.shape
    budget = _vmem_budget_bytes()
    itemsize = x.dtype.itemsize
    limit = int(budget * 0.6)
    w_bytes = (K * N + N) * itemsize

    # --- resident-weight path: pick the largest M tile that fits the budget -------
    tm = None
    for cand in (tm_target, 256, 128, 64):
        t = cand if M > cand else M
        need = (w_bytes                       # resident W + bias
                + 2 * t * K * itemsize        # double-buffered x blocks
                + 2 * t * N * itemsize        # double-buffered out blocks
                + t * N * 4)                  # f32 dot intermediate
        if need <= limit:
            tm = t
            break

    if tm is not None:
        pad = (-M) % tm
        xp = jnp.pad(x, ((0, pad), (0, 0))) if pad else x
        Mp = M + pad
        out = pl.pallas_call(
            _matmul_bias_resident_kernel,
            out_shape=jax.ShapeDtypeStruct((Mp, N), x.dtype),
            grid_spec=pltpu.PrefetchScalarGridSpec(
                num_scalar_prefetch=0,
                grid=(Mp // tm,),
                in_specs=[
                    pl.BlockSpec((tm, K), lambda i: (i, 0)),
                    pl.BlockSpec((K, N), lambda i: (0, 0)),   # resident weight
                    pl.BlockSpec((1, N), lambda i: (0, 0)),   # resident bias
                ],
                out_specs=pl.BlockSpec((tm, N), lambda i: (i, 0)),
            ),
            compiler_params=pltpu.CompilerParams(
                dimension_semantics=("parallel",),
                vmem_limit_bytes=budget),
        )(xp, w, b)
        return out[:M] if pad else out

    # --- tiled fallback (only for weights too large to hold resident) -------------
    # TODO(synk): pad ragged M/N/K here instead of falling back to the full dim.
    tm_t, tn, tk = _tile(M, tm_target), _tile(N, 512), _tile(K, 512)
    return pl.pallas_call(
        _matmul_bias_tiled_kernel,
        out_shape=jax.ShapeDtypeStruct((M, N), x.dtype),
        grid_spec=pltpu.PrefetchScalarGridSpec(
            num_scalar_prefetch=0,
            grid=(M // tm_t, N // tn, K // tk),
            in_specs=[
                pl.BlockSpec((tm_t, tk), lambda i, j, k: (i, k)),
                pl.BlockSpec((tk, tn), lambda i, j, k: (k, j)),
                pl.BlockSpec((1, tn), lambda i, j, k: (0, j)),
            ],
            out_specs=pl.BlockSpec((tm_t, tn), lambda i, j, k: (i, j)),
            scratch_shapes=[pltpu.VMEM((tm_t, tn), jnp.float32)],
        ),
        compiler_params=pltpu.CompilerParams(
            dimension_semantics=("parallel", "parallel", "arbitrary"),
            vmem_limit_bytes=budget),
    )(x, w, b)


# ---------------------------------------------------------------------------
# Flash attention (causal, head-major layout, head-blocked grid)
# ---------------------------------------------------------------------------
def _flash_kernel(q_ref, k_ref, v_ref, o_ref, m_ref, l_ref, acc_ref, *, tq, tk):
    qi = pl.program_id(2)
    ki = pl.program_id(3)

    @pl.when(ki == 0)
    def _init():
        m_ref[...] = jnp.full_like(m_ref, -jnp.inf)
        l_ref[...] = jnp.zeros_like(l_ref)
        acc_ref[...] = jnp.zeros_like(acc_ref)

    q_first = qi * tq
    q_last = qi * tq + (tq - 1)
    k_first = ki * tk
    k_last = ki * tk + (tk - 1)

    def _update(apply_mask):
        # Batched over the head block: (hb, tq, D) x (hb, tk, D) -> (hb, tq, tk).
        s = jnp.einsum("hqd,hkd->hqk", q_ref[...], k_ref[...],
                       preferred_element_type=jnp.float32)
        if apply_mask:
            row = q_first + jax.lax.broadcasted_iota(jnp.int32, (tq, tk), 0)
            col = k_first + jax.lax.broadcasted_iota(jnp.int32, (tq, tk), 1)
            s = jnp.where(row >= col, s, _MASK_VALUE)      # broadcasts over heads
        m_prev = m_ref[...]
        m_new = jnp.maximum(m_prev, jnp.max(s, axis=-1, keepdims=True))
        alpha = jnp.exp(m_prev - m_new)
        p = jnp.exp(s - m_new)
        l_ref[...] = alpha * l_ref[...] + jnp.sum(p, axis=-1, keepdims=True)
        acc_ref[...] = alpha * acc_ref[...] + jnp.einsum(
            "hqk,hkd->hqd", p.astype(v_ref.dtype), v_ref[...],
            preferred_element_type=jnp.float32)
        m_ref[...] = m_new

    # Strictly at/below the diagonal: no mask bookkeeping needed.
    @pl.when(k_last <= q_first)
    def _below():
        _update(apply_mask=False)

    # Tile intersects the diagonal: apply the causal mask.
    @pl.when(jnp.logical_and(k_last > q_first, k_first <= q_last))
    def _diag():
        _update(apply_mask=True)

    # Fully-above-diagonal tiles fall through (skipped; DMA elided by index clamp).

    @pl.when(ki == pl.num_programs(3) - 1)
    def _finalize():
        o_ref[...] = (acc_ref[...] *
                      pl.reciprocal(l_ref[...], approx=False)).astype(o_ref.dtype)


def flash_attention(q, k, v, *, t_tile_target=256):
    """q, k, v: (B, H, T, D) head-major. Returns (B, H, T, D)."""
    B, H, T, D = q.shape
    budget = _vmem_budget_bytes()

    tile = t_tile_target if T > t_tile_target else T
    pad = (-T) % tile
    if pad:
        cfg = ((0, 0), (0, 0), (0, pad), (0, 0))
        q, k, v = jnp.pad(q, cfg), jnp.pad(k, cfg), jnp.pad(v, cfg)
    Tp = T + pad
    nt = Tp // tile

    # Head-block size: as many heads per grid step as comfortably fit the budget.
    itemsize = q.dtype.itemsize
    per_head = (tile * D * itemsize * 2 * 3     # q/k/v double-buffered blocks
                + tile * D * itemsize * 2       # out double-buffered
                + tile * D * 4                  # f32 accumulator
                + 2 * tile * tile * 4)          # s / p f32 intermediates
    hb = 1
    for d in range(1, H + 1):
        if H % d == 0 and d * per_head <= int(budget * 0.5):
            hb = d

    kernel = functools.partial(_flash_kernel, tq=tile, tk=tile)

    def _q_map(b, h, qi, ki):
        return (b, h, qi, 0)

    def _kv_map(b, h, qi, ki):
        # Clamp above-diagonal kv tiles back to the diagonal block; the block index
        # is then unchanged step-to-step, so Pallas elides the DMA for skipped steps.
        return (b, h, jnp.minimum(ki, qi), 0)

    out = pl.pallas_call(
        kernel,
        out_shape=jax.ShapeDtypeStruct((B, H, Tp, D), q.dtype),
        grid_spec=pltpu.PrefetchScalarGridSpec(
            num_scalar_prefetch=0,
            grid=(B, H // hb, nt, nt),
            in_specs=[
                pl.BlockSpec((None, hb, tile, D), _q_map),   # q (resident across kv)
                pl.BlockSpec((None, hb, tile, D), _kv_map),  # k
                pl.BlockSpec((None, hb, tile, D), _kv_map),  # v
            ],
            out_specs=pl.BlockSpec((None, hb, tile, D), _q_map),
            scratch_shapes=[
                pltpu.VMEM((hb, tile, 1), jnp.float32),   # running row max m
                pltpu.VMEM((hb, tile, 1), jnp.float32),   # running denominator l
                pltpu.VMEM((hb, tile, D), jnp.float32),   # f32 output accumulator
            ],
        ),
        compiler_params=pltpu.CompilerParams(
            dimension_semantics=("parallel", "parallel", "parallel", "arbitrary"),
            vmem_limit_bytes=budget),
    )(q, k, v)
    return out[:, :, :T, :] if pad else out


# ---------------------------------------------------------------------------
# Full forward pass (eval mode: dropout omitted)
# ---------------------------------------------------------------------------
def _causal_self_attention(x, w_attn, b_attn, w_proj, b_proj, *, n_head):
    """x: (B, T, C). w_attn: (C, 3C), b_attn: (1, 3C), w_proj: (C, C), b_proj: (1, C)."""
    B, T, C = x.shape
    assert C % n_head == 0
    D = C // n_head

    # Fold 1/sqrt(D) into the Q columns of the QKV projection (tiny one-time op),
    # so the flash kernel never re-applies the scale per kv step.
    scale = 1.0 / math.sqrt(D)
    col_scale = jnp.concatenate([jnp.full((C,), scale, dtype=jnp.float32),
                                 jnp.ones((2 * C,), dtype=jnp.float32)])
    w_attn_s = (w_attn.astype(jnp.float32) * col_scale).astype(w_attn.dtype)
    b_attn_s = (b_attn.astype(jnp.float32) * col_scale).astype(b_attn.dtype)

    # QKV projection (resident-weight Pallas GEMM) on the (B*T, C) slab.
    qkv = matmul_bias(x.reshape(B * T, C), w_attn_s, b_attn_s)       # (B*T, 3C)

    # Head-major layout plumbing.
    # TODO(synk): fuse these transposes into the projection kernels' BlockSpecs.
    qkv = qkv.reshape(B, T, 3, n_head, D)
    q = qkv[:, :, 0].transpose(0, 2, 1, 3)                           # (B, H, T, D)
    k = qkv[:, :, 1].transpose(0, 2, 1, 3)
    v = qkv[:, :, 2].transpose(0, 2, 1, 3)

    y = flash_attention(q, k, v)                                     # (B, H, T, D)

    y = y.transpose(0, 2, 1, 3).reshape(B * T, C)
    out = matmul_bias(y, w_proj, b_proj)                             # (B*T, C)
    return out.reshape(B, T, C)
    # TODO(synk): attn_dropout / resid_dropout are identity in eval mode and omitted.


causal_self_attention = jax.jit(_causal_self_attention, static_argnames=("n_head",))


# ---------------------------------------------------------------------------
# Pure-JAX reference and self-test
# ---------------------------------------------------------------------------
def _reference(x, w_attn, b_attn, w_proj, b_proj, n_head):
    B, T, C = x.shape
    D = C // n_head
    qkv = x @ w_attn + b_attn
    q, k, v = jnp.split(qkv, 3, axis=-1)
    q = q.reshape(B, T, n_head, D).transpose(0, 2, 1, 3)
    k = k.reshape(B, T, n_head, D).transpose(0, 2, 1, 3)
    v = v.reshape(B, T, n_head, D).transpose(0, 2, 1, 3)
    att = jnp.einsum("bhtd,bhsd->bhts", q, k) / math.sqrt(D)
    mask = jnp.triu(jnp.ones((T, T), dtype=bool), k=1)
    att = jnp.where(mask[None, None], -jnp.inf, att)
    att = jax.nn.softmax(att, axis=-1)
    y = jnp.einsum("bhts,bhsd->bhtd", att, v)
    y = y.transpose(0, 2, 1, 3).reshape(B, T, C)
    return y @ w_proj + b_proj


def _make_params(key, C, dtype):
    k1, k2, k3, k4 = jax.random.split(key, 4)
    bound = 1.0 / math.sqrt(C)
    w_attn = jax.random.uniform(k1, (C, 3 * C), minval=-bound, maxval=bound, dtype=jnp.float32)
    b_attn = jax.random.uniform(k2, (1, 3 * C), minval=-bound, maxval=bound, dtype=jnp.float32)
    w_proj = jax.random.uniform(k3, (C, C), minval=-bound, maxval=bound, dtype=jnp.float32)
    b_proj = jax.random.uniform(k4, (1, C), minval=-bound, maxval=bound, dtype=jnp.float32)
    return tuple(p.astype(dtype) for p in (w_attn, b_attn, w_proj, b_proj))


def _run_case(key, B, T, C, n_head, dtype, atol, rtol):
    kx, kp = jax.random.split(key)
    x = jax.random.normal(kx, (B, T, C), dtype=jnp.float32).astype(dtype)
    w_attn, b_attn, w_proj, b_proj = _make_params(kp, C, dtype)

    out = causal_self_attention(x, w_attn, b_attn, w_proj, b_proj, n_head=n_head)
    out = jax.block_until_ready(out)
    assert out.shape == (B, T, C)

    f32 = lambda a: a.astype(jnp.float32)
    ref = _reference(f32(x), f32(w_attn), f32(b_attn), f32(w_proj), f32(b_proj), n_head)
    assert jnp.allclose(f32(out), ref, atol=atol, rtol=rtol), (
        f"mismatch (B={B} T={T} C={C} H={n_head} dtype={dtype}): "
        f"max abs diff {jnp.max(jnp.abs(f32(out) - ref))}")


if __name__ == "__main__":
    key = jax.random.PRNGKey(0)
    k0, k1, k2 = jax.random.split(key, 3)

    # Small shape (single tile per axis), f32.
    _run_case(k0, B=2, T=8, C=32, n_head=4, dtype=jnp.float32, atol=1e-2, rtol=1e-2)
    # Larger shape exercising the online softmax / head-blocked grid, f32.
    _run_case(k1, B=2, T=256, C=128, n_head=4, dtype=jnp.float32, atol=1e-2, rtol=1e-2)
    # bf16 MXU operands / f32 accumulation path (loose tolerance for bf16 rounding).
    _run_case(k2, B=2, T=256, C=128, n_head=4, dtype=jnp.bfloat16, atol=1e-1, rtol=1e-1)

    print("KERNEL_OK")
</pallas_src>

<mosaic_0001>
module attributes {stable_mosaic.version = 11 : i64} {
  func.func @_matmul_bias_resident_kernel(%arg0: i32, %arg1: memref<16x32xf32, #tpu.memory_space<vmem>>, %arg2: memref<32x96xf32, #tpu.memory_space<vmem>>, %arg3: memref<1x96xf32, #tpu.memory_space<vmem>>, %arg4: memref<16x96xf32, #tpu.memory_space<vmem>>) attributes {dimension_semantics = [#tpu.dimension_semantics<parallel>], iteration_bounds = array<i64: 1>, scalar_prefetch = 0 : i64, scratch_operands = 0 : i64, tpu.core_type = #tpu.core_type<tc>, window_params = [{transform_indices = @transform_0, window_bounds = array<i64: 16, 32>}, {pipeline_mode = #tpu.pipeline_mode<synchronous>, transform_indices = @transform_1, window_bounds = array<i64: 32, 96>}, {pipeline_mode = #tpu.pipeline_mode<synchronous>, transform_indices = @transform_2, window_bounds = array<i64: 1, 96>}, {transform_indices = @transform_3, window_bounds = array<i64: 16, 96>}]} {
    %c0 = arith.constant 0 : index
    %c0_0 = arith.constant 0 : index
    %0 = vector.load %arg1[%c0, %c0_0] : memref<16x32xf32, #tpu.memory_space<vmem>>, vector<16x32xf32>
    %c0_1 = arith.constant 0 : index
    %c0_2 = arith.constant 0 : index
    %1 = vector.load %arg2[%c0_1, %c0_2] : memref<32x96xf32, #tpu.memory_space<vmem>>, vector<32x96xf32>
    %cst = arith.constant dense<0.000000e+00> : vector<16x96xf32>
    %2 = tpu.matmul %0, %1, %cst {dimension_numbers = #tpu.dot_dimension_numbers<[1], [0], [0], [1], [0, 0, 1, 1], [], []>} : vector<16x32xf32>, vector<32x96xf32>, vector<16x96xf32> -> vector<16x96xf32>
    %c0_3 = arith.constant 0 : index
    %c0_4 = arith.constant 0 : index
    %3 = vector.load %arg3[%c0_3, %c0_4] : memref<1x96xf32, #tpu.memory_space<vmem>>, vector<1x96xf32>
    %4 = vector.broadcast %3 : vector<1x96xf32> to vector<16x96xf32>
    %5 = arith.addf %2, %4 : vector<16x96xf32>
    %c0_5 = arith.constant 0 : index
    %c0_6 = arith.constant 0 : index
    %6 = vector.load %arg4[%c0_5, %c0_6] : memref<16x96xf32, #tpu.memory_space<vmem>>, vector<16x96xf32>
    tpu.vector_store %arg4[%c0_5, %c0_6], %5 {strides = array<i32>} : memref<16x96xf32, #tpu.memory_space<vmem>>, vector<16x96xf32>,
    return
  }
  func.func @transform_0(%arg0: i32) -> (i32, i32) {
    %c0_i32 = arith.constant 0 : i32
    %c0_i32_0 = arith.constant 0 : i32
    return %arg0, %c0_i32 : i32, i32
  }
  func.func @transform_1(%arg0: i32) -> (i32, i32) {
    %c0_i32 = arith.constant 0 : i32
    %c0_i32_0 = arith.constant 0 : i32
    %c0_i32_1 = arith.constant 0 : i32
    return %c0_i32, %c0_i32_0 : i32, i32
  }
  func.func @transform_2(%arg0: i32) -> (i32, i32) {
    %c0_i32 = arith.constant 0 : i32
    %c0_i32_0 = arith.constant 0 : i32
    %c0_i32_1 = arith.constant 0 : i32
    return %c0_i32, %c0_i32_0 : i32, i32
  }
  func.func @transform_3(%arg0: i32) -> (i32, i32) {
    %c0_i32 = arith.constant 0 : i32
    %c0_i32_0 = arith.constant 0 : i32
    return %arg0, %c0_i32 : i32, i32
  }
}

module attributes {stable_mosaic.version = 11 : i64} {
  func.func @_matmul_bias_resident_kernel(%arg0: i32, %arg1: memref<16x32xf32, #tpu.memory_space<vmem>>, %arg2: memref<32x32xf32, #tpu.memory_space<vmem>>, %arg3: memref<1x32xf32, #tpu.memory_space<vmem>>, %arg4: memref<16x32xf32, #tpu.memory_space<vmem>>) attributes {dimension_semantics = [#tpu.dimension_semantics<parallel>], iteration_bounds = array<i64: 1>, scalar_prefetch = 0 : i64, scratch_operands = 0 : i64, tpu.core_type = #tpu.core_type<tc>, window_params = [{transform_indices = @transform_0, window_bounds = array<i64: 16, 32>}, {pipeline_mode = #tpu.pipeline_mode<synchronous>, transform_indices = @transform_1, window_bounds = array<i64: 32, 32>}, {pipeline_mode = #tpu.pipeline_mode<synchronous>, transform_indices = @transform_2, window_bounds = array<i64: 1, 32>}, {transform_indices = @transform_3, window_bounds = array<i64: 16, 32>}]} {
    %c0 = arith.constant 0 : index
    %c0_0 = arith.constant 0 : index
    %0 = vector.load %arg1[%c0, %c0_0] : memref<16x32xf32, #tpu.memory_space<vmem>>, vector<16x32xf32>
    %c0_1 = arith.constant 0 : index
    %c0_2 = arith.constant 0 : index
    %1 = vector.load %arg2[%c0_1, %c0_2] : memref<32x32xf32, #tpu.memory_space<vmem>>, vector<32x32xf32>
    %cst = arith.constant dense<0.000000e+00> : vector<16x32xf32>
    %2 = tpu.matmul %0, %1, %cst {dimension_numbers = #tpu.dot_dimension_numbers<[1], [0], [0], [1], [0, 0, 1, 1], [], []>} : vector<16x32xf32>, vector<32x32xf32>, vector<16x32xf32> -> vector<16x32xf32>
    %c0_3 = arith.constant 0 : index
    %c0_4 = arith.constant 0 : index
    %3 = vector.load %arg3[%c0_3, %c0_4] : memref<1x32xf32, #tpu.memory_space<vmem>>, vector<1x32xf32>
    %4 = vector.broadcast %3 : vector<1x32xf32> to vector<16x32xf32>
    %5 = arith.addf %2, %4 : vector<16x32xf32>
    %c0_5 = arith.constant 0 : index
    %c0_6 = arith.constant 0 : index
    %6 = vector.load %arg4[%c0_5, %c0_6] : memref<16x32xf32, #tpu.memory_space<vmem>>, vector<16x32xf32>
    tpu.vector_store %arg4[%c0_5, %c0_6], %5 {strides = array<i32>} : memref<16x32xf32, #tpu.memory_space<vmem>>, vector<16x32xf32>,
    return
  }
  func.func @transform_0(%arg0: i32) -> (i32, i32) {
    %c0_i32 = arith.constant 0 : i32
    %c0_i32_0 = arith.constant 0 : i32
    return %arg0, %c0_i32 : i32, i32
  }
  func.func @transform_1(%arg0: i32) -> (i32, i32) {
    %c0_i32 = arith.constant 0 : i32
    %c0_i32_0 = arith.constant 0 : i32
    %c0_i32_1 = arith.constant 0 : i32
    return %c0_i32, %c0_i32_0 : i32, i32
  }
  func.func @transform_2(%arg0: i32) -> (i32, i32) {
    %c0_i32 = arith.constant 0 : i32
    %c0_i32_0 = arith.constant 0 : i32
    %c0_i32_1 = arith.constant 0 : i32
    return %c0_i32, %c0_i32_0 : i32, i32
  }
  func.func @transform_3(%arg0: i32) -> (i32, i32) {
    %c0_i32 = arith.constant 0 : i32
    %c0_i32_0 = arith.constant 0 : i32
    return %arg0, %c0_i32 : i32, i32
  }
}

module attributes {stable_mosaic.version = 11 : i64} {
  func.func @_flash_kernel(%arg0: i32, %arg1: i32, %arg2: i32, %arg3: i32, %arg4: memref<1x4x8x8xf32, #tpu.memory_space<vmem>>, %arg5: memref<1x4x8x8xf32, #tpu.memory_space<vmem>>, %arg6: memref<1x4x8x8xf32, #tpu.memory_space<vmem>>, %arg7: memref<1x4x8x8xf32, #tpu.memory_space<vmem>>, %arg8: memref<4x8x1xf32, #tpu.memory_space<vmem>>, %arg9: memref<4x8x1xf32, #tpu.memory_space<vmem>>, %arg10: memref<4x8x8xf32, #tpu.memory_space<vmem>>) attributes {dimension_semantics = [#tpu.dimension_semantics<parallel>, #tpu.dimension_semantics<parallel>, #tpu.dimension_semantics<parallel>, #tpu.dimension_semantics<arbitrary>], iteration_bounds = array<i64: 2, 1, 1, 1>, scalar_prefetch = 0 : i64, scratch_operands = 3 : i64, tpu.core_type = #tpu.core_type<tc>, window_params = [{transform_indices = @transform_0, window_bounds = array<i64: 1, 4, 8, 8>}, {transform_indices = @transform_1, window_bounds = array<i64: 1, 4, 8, 8>}, {transform_indices = @transform_2, window_bounds = array<i64: 1, 4, 8, 8>}, {transform_indices = @transform_3, window_bounds = array<i64: 1, 4, 8, 8>}]} {
    %c0_i32 = arith.constant 0 : i32
    %0 = arith.cmpi eq, %arg3, %c0_i32 : i32
    %1 = arith.extui %0 : i1 to i32
    %c0_i32_0 = arith.constant 0 : i32
    %2 = arith.cmpi ne, %1, %c0_i32_0 : i32
    scf.if %2 {
      %cst = arith.constant 0xFF800000 : f32
      %20 = vector.broadcast %cst : f32 to vector<4x8x1xf32>
      %c0 = arith.constant 0 : index
      %c0_9 = arith.constant 0 : index
      %c0_10 = arith.constant 0 : index
      %21 = vector.load %arg8[%c0, %c0_9, %c0_10] : memref<4x8x1xf32, #tpu.memory_space<vmem>>, vector<4x8x1xf32>
      tpu.vector_store %arg8[%c0, %c0_9, %c0_10], %20 {strides = array<i32>} : memref<4x8x1xf32, #tpu.memory_space<vmem>>, vector<4x8x1xf32>,
      %cst_11 = arith.constant 0.000000e+00 : f32
      %22 = vector.broadcast %cst_11 : f32 to vector<4x8x1xf32>
      %c0_12 = arith.constant 0 : index
      %c0_13 = arith.constant 0 : index
      %c0_14 = arith.constant 0 : index
      %23 = vector.load %arg9[%c0_12, %c0_13, %c0_14] : memref<4x8x1xf32, #tpu.memory_space<vmem>>, vector<4x8x1xf32>
      tpu.vector_store %arg9[%c0_12, %c0_13, %c0_14], %22 {strides = array<i32>} : memref<4x8x1xf32, #tpu.memory_space<vmem>>, vector<4x8x1xf32>,
      %cst_15 = arith.constant 0.000000e+00 : f32
      %24 = vector.broadcast %cst_15 : f32 to vector<4x8x8xf32>
      %c0_16 = arith.constant 0 : index
      %c0_17 = arith.constant 0 : index
      %c0_18 = arith.constant 0 : index
      %25 = vector.load %arg10[%c0_16, %c0_17, %c0_18] : memref<4x8x8xf32, #tpu.memory_space<vmem>>, vector<4x8x8xf32>
      tpu.vector_store %arg10[%c0_16, %c0_17, %c0_18], %24 {strides = array<i32>} : memref<4x8x8xf32, #tpu.memory_space<vmem>>, vector<4x8x8xf32>,
    } else {
    }
    %c8_i32 = arith.constant 8 : i32
    %3 = arith.muli %arg2, %c8_i32 : i32
    %c8_i32_1 = arith.constant 8 : i32
    %4 = arith.muli %arg2, %c8_i32_1 : i32
    %c7_i32 = arith.constant 7 : i32
    %5 = arith.addi %4, %c7_i32 : i32
    %c8_i32_2 = arith.constant 8 : i32
    %6 = arith.muli %arg3, %c8_i32_2 : i32
    %c8_i32_3 = arith.constant 8 : i32
    %7 = arith.muli %arg3, %c8_i32_3 : i32
    %c7_i32_4 = arith.constant 7 : i32
    %8 = arith.addi %7, %c7_i32_4 : i32
    %9 = arith.cmpi sle, %8, %3 : i32
    %10 = arith.extui %9 : i1 to i32
    %c0_i32_5 = arith.constant 0 : i32
    %11 = arith.cmpi ne, %10, %c0_i32_5 : i32
    scf.if %11 {
      %c0 = arith.constant 0 : index
      %c0_9 = arith.constant 0 : index
      %c0_10 = arith.constant 0 : index
      %c0_11 = arith.constant 0 : index
      %20 = vector.load %arg4[%c0, %c0_9, %c0_10, %c0_11] : memref<1x4x8x8xf32, #tpu.memory_space<vmem>>, vector<1x4x8x8xf32>
      %21 = vector.shape_cast %20 : vector<1x4x8x8xf32> to vector<4x8x8xf32>
      %c0_12 = arith.constant 0 : index
      %c0_13 = arith.constant 0 : index
      %c0_14 = arith.constant 0 : index
      %c0_15 = arith.constant 0 : index
      %22 = vector.load %arg5[%c0_12, %c0_13, %c0_14, %c0_15] : memref<1x4x8x8xf32, #tpu.memory_space<vmem>>, vector<1x4x8x8xf32>
      %23 = vector.shape_cast %22 : vector<1x4x8x8xf32> to vector<4x8x8xf32>
      "tpu.trace_start"() <{level = 10 : i32, message = "hqd,hkd->hqk"}> : () -> ()
      %cst = arith.constant dense<0.000000e+00> : vector<4x8x8xf32>
      %24 = tpu.matmul %21, %23, %cst {dimension_numbers = #tpu.dot_dimension_numbers<[2], [2], [1], [1], [0, 0, 0, 1, 1, 1], [0], [0]>} : vector<4x8x8xf32>, vector<4x8x8xf32>, vector<4x8x8xf32> -> vector<4x8x8xf32>
      "tpu.trace_stop"() : () -> ()
      %c0_16 = arith.constant 0 : index
      %c0_17 = arith.constant 0 : index
      %c0_18 = arith.constant 0 : index
      %25 = vector.load %arg8[%c0_16, %c0_17, %c0_18] : memref<4x8x1xf32, #tpu.memory_space<vmem>>, vector<4x8x1xf32>
      %cst_19 = arith.constant dense<0xFF800000> : vector<4x8xf32>
      %26 = vector.multi_reduction <maximumf>, %24, %cst_19 [2] : vector<4x8x8xf32> to vector<4x8xf32>
      %27 = vector.shape_cast %26 : vector<4x8xf32> to vector<4x8x1xf32>
      %28 = arith.maximumf %25, %27 : vector<4x8x1xf32>
      %29 = arith.subf %25, %28 : vector<4x8x1xf32>
      %30 = math.exp %29 : vector<4x8x1xf32>
      %31 = vector.broadcast %28 : vector<4x8x1xf32> to vector<4x8x8xf32>
      %32 = arith.subf %24, %31 : vector<4x8x8xf32>
      %33 = math.exp %32 : vector<4x8x8xf32>
      %c0_20 = arith.constant 0 : index
      %c0_21 = arith.constant 0 : index
      %c0_22 = arith.constant 0 : index
      %34 = vector.load %arg9[%c0_20, %c0_21, %c0_22] : memref<4x8x1xf32, #tpu.memory_space<vmem>>, vector<4x8x1xf32>
      %35 = arith.mulf %30, %34 : vector<4x8x1xf32>
      %cst_23 = arith.constant dense<0.000000e+00> : vector<4x8xf32>
      %36 = vector.multi_reduction <add>, %33, %cst_23 [2] : vector<4x8x8xf32> to vector<4x8xf32>
      %37 = vector.shape_cast %36 : vector<4x8xf32> to vector<4x8x1xf32>
      %38 = arith.addf %35, %37 : vector<4x8x1xf32>
      %c0_24 = arith.constant 0 : index
      %c0_25 = arith.constant 0 : index
      %c0_26 = arith.constant 0 : index
      %39 = vector.load %arg9[%c0_24, %c0_25, %c0_26] : memref<4x8x1xf32, #tpu.memory_space<vmem>>, vector<4x8x1xf32>
      tpu.vector_store %arg9[%c0_24, %c0_25, %c0_26], %38 {strides = array<i32>} : memref<4x8x1xf32, #tpu.memory_space<vmem>>, vector<4x8x1xf32>,
      %c0_27 = arith.constant 0 : index
      %c0_28 = arith.constant 0 : index
      %c0_29 = arith.constant 0 : index
      %40 = vector.load %arg10[%c0_27, %c0_28, %c0_29] : memref<4x8x8xf32, #tpu.memory_space<vmem>>, vector<4x8x8xf32>
      %41 = vector.broadcast %30 : vector<4x8x1xf32> to vector<4x8x8xf32>
      %42 = arith.mulf %41, %40 : vector<4x8x8xf32>
      %c0_30 = arith.constant 0 : index
      %c0_31 = arith.constant 0 : index
      %c0_32 = arith.constant 0 : index
      %c0_33 = arith.constant 0 : index
      %43 = vector.load %arg6[%c0_30, %c0_31, %c0_32, %c0_33] : memref<1x4x8x8xf32, #tpu.memory_space<vmem>>, vector<1x4x8x8xf32>
      %44 = vector.shape_cast %43 : vector<1x4x8x8xf32> to vector<4x8x8xf32>
      "tpu.trace_start"() <{level = 10 : i32, message = "hqk,hkd->hqd"}> : () -> ()
      %cst_34 = arith.constant dense<0.000000e+00> : vector<4x8x8xf32>
      %45 = tpu.matmul %33, %44, %cst_34 {dimension_numbers = #tpu.dot_dimension_numbers<[2], [1], [1], [2], [0, 0, 0, 1, 1, 2], [0], [0]>} : vector<4x8x8xf32>, vector<4x8x8xf32>, vector<4x8x8xf32> -> vector<4x8x8xf32>
      "tpu.trace_stop"() : () -> ()
      %46 = arith.addf %42, %45 : vector<4x8x8xf32>
      %c0_35 = arith.constant 0 : index
      %c0_36 = arith.constant 0 : index
      %c0_37 = arith.constant 0 : index
      %47 = vector.load %arg10[%c0_35, %c0_36, %c0_37] : memref<4x8x8xf32, #tpu.memory_space<vmem>>, vector<4x8x8xf32>
      tpu.vector_store %arg10[%c0_35, %c0_36, %c0_37], %46 {strides = array<i32>} : memref<4x8x8xf32, #tpu.memory_space<vmem>>, vector<4x8x8xf32>,
      %c0_38 = arith.constant 0 : index
      %c0_39 = arith.constant 0 : index
      %c0_40 = arith.constant 0 : index
      %48 = vector.load %arg8[%c0_38, %c0_39, %c0_40] : memref<4x8x1xf32, #tpu.memory_space<vmem>>, vector<4x8x1xf32>
      tpu.vector_store %arg8[%c0_38, %c0_39, %c0_40], %28 {strides = array<i32>} : memref<4x8x1xf32, #tpu.memory_space<vmem>>, vector<4x8x1xf32>,
    } else {
    }
    %12 = arith.cmpi sgt, %8, %3 : i32
    %13 = arith.cmpi sle, %6, %5 : i32
    %14 = arith.andi %12, %13 : i1
    %15 = arith.extui %14 : i1 to i32
    %c0_i32_6 = arith.constant 0 : i32
    %16 = arith.cmpi ne, %15, %c0_i32_6 : i32
    scf.if %16 {
      %c0 = arith.constant 0 : index
      %c0_9 = arith.constant 0 : index
      %c0_10 = arith.constant 0 : index
      %c0_11 = arith.constant 0 : index
      %20 = vector.load %arg4[%c0, %c0_9, %c0_10, %c0_11] : memref<1x4x8x8xf32, #tpu.memory_space<vmem>>, vector<1x4x8x8xf32>
      %21 = vector.shape_cast %20 : vector<1x4x8x8xf32> to vector<4x8x8xf32>
      %c0_12 = arith.constant 0 : index
      %c0_13 = arith.constant 0 : index
      %c0_14 = arith.constant 0 : index
      %c0_15 = arith.constant 0 : index
      %22 = vector.load %arg5[%c0_12, %c0_13, %c0_14, %c0_15] : memref<1x4x8x8xf32, #tpu.memory_space<vmem>>, vector<1x4x8x8xf32>
      %23 = vector.shape_cast %22 : vector<1x4x8x8xf32> to vector<4x8x8xf32>
      "tpu.trace_start"() <{level = 10 : i32, message = "hqd,hkd->hqk"}> : () -> ()
      %cst = arith.constant dense<0.000000e+00> : vector<4x8x8xf32>
      %24 = tpu.matmul %21, %23, %cst {dimension_numbers = #tpu.dot_dimension_numbers<[2], [2], [1], [1], [0, 0, 0, 1, 1, 1], [0], [0]>} : vector<4x8x8xf32>, vector<4x8x8xf32>, vector<4x8x8xf32> -> vector<4x8x8xf32>
      "tpu.trace_stop"() : () -> ()
      %25 = tpu.iota {dimensions = array<i32: 0>} : vector<8x8xi32>
      %26 = vector.broadcast %3 : i32 to vector<8x8xi32>
      %27 = arith.addi %26, %25 : vector<8x8xi32>
      %28 = tpu.iota {dimensions = array<i32: 1>} : vector<8x8xi32>
      %29 = vector.broadcast %6 : i32 to vector<8x8xi32>
      %30 = arith.addi %29, %28 : vector<8x8xi32>
      %31 = arith.cmpi sge, %27, %30 : vector<8x8xi32>
      %cst_16 = arith.constant -1.000000e+30 : f32
      %32 = vector.shape_cast %31 : vector<8x8xi1> to vector<1x8x8xi1>
      %33 = vector.broadcast %32 : vector<1x8x8xi1> to vector<4x8x8xi1>
      %34 = vector.broadcast %cst_16 : f32 to vector<4x8x8xf32>
      %35 = arith.select %33, %24, %34 : vector<4x8x8xi1>, vector<4x8x8xf32>
      %c0_17 = arith.constant 0 : index
      %c0_18 = arith.constant 0 : index
      %c0_19 = arith.constant 0 : index
      %36 = vector.load %arg8[%c0_17, %c0_18, %c0_19] : memref<4x8x1xf32, #tpu.memory_space<vmem>>, vector<4x8x1xf32>
      %cst_20 = arith.constant dense<0xFF800000> : vector<4x8xf32>
      %37 = vector.multi_reduction <maximumf>, %35, %cst_20 [2] : vector<4x8x8xf32> to vector<4x8xf32>
      %38 = vector.shape_cast %37 : vector<4x8xf32> to vector<4x8x1xf32>
      %39 = arith.maximumf %36, %38 : vector<4x8x1xf32>
      %40 = arith.subf %36, %39 : vector<4x8x1xf32>
      %41 = math.exp %40 : vector<4x8x1xf32>
      %42 = vector.broadcast %39 : vector<4x8x1xf32> to vector<4x8x8xf32>
      %43 = arith.subf %35, %42 : vector<4x8x8xf32>
      %44 = math.exp %43 : vector<4x8x8xf32>
      %c0_21 = arith.constant 0 : index
      %c0_22 = arith.constant 0 : index
      %c0_23 = arith.constant 0 : index
      %45 = vector.load %arg9[%c0_21, %c0_22, %c0_23] : memref<4x8x1xf32, #tpu.memory_space<vmem>>, vector<4x8x1xf32>
      %46 = arith.mulf %41, %45 : vector<4x8x1xf32>
      %cst_24 = arith.constant dense<0.000000e+00> : vector<4x8xf32>
      %47 = vector.multi_reduction <add>, %44, %cst_24 [2] : vector<4x8x8xf32> to vector<4x8xf32>
      %48 = vector.shape_cast %47 : vector<4x8xf32> to vector<4x8x1xf32>
      %49 = arith.addf %46, %48 : vector<4x8x1xf32>
      %c0_25 = arith.constant 0 : index
      %c0_26 = arith.constant 0 : index
      %c0_27 = arith.constant 0 : index
      %50 = vector.load %arg9[%c0_25, %c0_26, %c0_27] : memref<4x8x1xf32, #tpu.memory_space<vmem>>, vector<4x8x1xf32>
      tpu.vector_store %arg9[%c0_25, %c0_26, %c0_27], %49 {strides = array<i32>} : memref<4x8x1xf32, #tpu.memory_space<vmem>>, vector<4x8x1xf32>,
      %c0_28 = arith.constant 0 : index
      %c0_29 = arith.constant 0 : index
      %c0_30 = arith.constant 0 : index
      %51 = vector.load %arg10[%c0_28, %c0_29, %c0_30] : memref<4x8x8xf32, #tpu.memory_space<vmem>>, vector<4x8x8xf32>
      %52 = vector.broadcast %41 : vector<4x8x1xf32> to vector<4x8x8xf32>
      %53 = arith.mulf %52, %51 : vector<4x8x8xf32>
      %c0_31 = arith.constant 0 : index
      %c0_32 = arith.constant 0 : index
      %c0_33 = arith.constant 0 : index
      %c0_34 = arith.constant 0 : index
      %54 = vector.load %arg6[%c0_31, %c0_32, %c0_33, %c0_34] : memref<1x4x8x8xf32, #tpu.memory_space<vmem>>, vector<1x4x8x8xf32>
      %55 = vector.shape_cast %54 : vector<1x4x8x8xf32> to vector<4x8x8xf32>
      "tpu.trace_start"() <{level = 10 : i32, message = "hqk,hkd->hqd"}> : () -> ()
      %cst_35 = arith.constant dense<0.000000e+00> : vector<4x8x8xf32>
      %56 = tpu.matmul %44, %55, %cst_35 {dimension_numbers = #tpu.dot_dimension_numbers<[2], [1], [1], [2], [0, 0, 0, 1, 1, 2], [0], [0]>} : vector<4x8x8xf32>, vector<4x8x8xf32>, vector<4x8x8xf32> -> vector<4x8x8xf32>
      "tpu.trace_stop"() : () -> ()
      %57 = arith.addf %53, %56 : vector<4x8x8xf32>
      %c0_36 = arith.constant 0 : index
      %c0_37 = arith.constant 0 : index
      %c0_38 = arith.constant 0 : index
      %58 = vector.load %arg10[%c0_36, %c0_37, %c0_38] : memref<4x8x8xf32, #tpu.memory_space<vmem>>, vector<4x8x8xf32>
      tpu.vector_store %arg10[%c0_36, %c0_37, %c0_38], %57 {strides = array<i32>} : memref<4x8x8xf32, #tpu.memory_space<vmem>>, vector<4x8x8xf32>,
      %c0_39 = arith.constant 0 : index
      %c0_40 = arith.constant 0 : index
      %c0_41 = arith.constant 0 : index
      %59 = vector.load %arg8[%c0_39, %c0_40, %c0_41] : memref<4x8x1xf32, #tpu.memory_space<vmem>>, vector<4x8x1xf32>
      tpu.vector_store %arg8[%c0_39, %c0_40, %c0_41], %39 {strides = array<i32>} : memref<4x8x1xf32, #tpu.memory_space<vmem>>, vector<4x8x1xf32>,
    } else {
    }
    %c0_i32_7 = arith.constant 0 : i32
    %17 = arith.cmpi eq, %arg3, %c0_i32_7 : i32
    %18 = arith.extui %17 : i1 to i32
    %c0_i32_8 = arith.constant 0 : i32
    %19 = arith.cmpi ne, %18, %c0_i32_8 : i32
    scf.if %19 {
      %c0 = arith.constant 0 : index
      %c0_9 = arith.constant 0 : index
      %c0_10 = arith.constant 0 : index
      %20 = vector.load %arg10[%c0, %c0_9, %c0_10] : memref<4x8x8xf32, #tpu.memory_space<vmem>>, vector<4x8x8xf32>
      %c0_11 = arith.constant 0 : index
      %c0_12 = arith.constant 0 : index
      %c0_13 = arith.constant 0 : index
      %21 = vector.load %arg9[%c0_11, %c0_12, %c0_13] : memref<4x8x1xf32, #tpu.memory_space<vmem>>, vector<4x8x1xf32>
      %22 = tpu.reciprocal %21 : vector<4x8x1xf32> -> vector<4x8x1xf32>
      %23 = vector.broadcast %22 : vector<4x8x1xf32> to vector<4x8x8xf32>
      %24 = arith.mulf %20, %23 : vector<4x8x8xf32>
      %c0_14 = arith.constant 0 : index
      %c0_15 = arith.constant 0 : index
      %c0_16 = arith.constant 0 : index
      %c0_17 = arith.constant 0 : index
      %25 = vector.load %arg7[%c0_14, %c0_15, %c0_16, %c0_17] : memref<1x4x8x8xf32, #tpu.memory_space<vmem>>, vector<1x4x8x8xf32>
      %26 = vector.shape_cast %25 : vector<1x4x8x8xf32> to vector<4x8x8xf32>
      %27 = vector.shape_cast %24 : vector<4x8x8xf32> to vector<1x4x8x8xf32>
      tpu.vector_store %arg7[%c0_14, %c0_15, %c0_16, %c0_17], %27 {strides = array<i32>} : memref<1x4x8x8xf32, #tpu.memory_space<vmem>>, vector<1x4x8x8xf32>,
    } else {
    }
    return
  }
  func.func @transform_0(%arg0: i32, %arg1: i32, %arg2: i32, %arg3: i32) -> (i32, i32, i32, i32) {
    %c0_i32 = arith.constant 0 : i32
    %c0_i32_0 = arith.constant 0 : i32
    return %arg0, %arg1, %arg2, %c0_i32 : i32, i32, i32, i32
  }
  func.func @transform_1(%arg0: i32, %arg1: i32, %arg2: i32, %arg3: i32) -> (i32, i32, i32, i32) {
    %0 = arith.minsi %arg3, %arg2 : i32
    %c0_i32 = arith.constant 0 : i32
    %c0_i32_0 = arith.constant 0 : i32
    return %arg0, %arg1, %0, %c0_i32 : i32, i32, i32, i32
  }
  func.func @transform_2(%arg0: i32, %arg1: i32, %arg2: i32, %arg3: i32) -> (i32, i32, i32, i32) {
    %0 = arith.minsi %arg3, %arg2 : i32
    %c0_i32 = arith.constant 0 : i32
    %c0_i32_0 = arith.constant 0 : i32
    return %arg0, %arg1, %0, %c0_i32 : i32, i32, i32, i32
  }
  func.func @transform_3(%arg0: i32, %arg1: i32, %arg2: i32, %arg3: i32) -> (i32, i32, i32, i32) {
    %c0_i32 = arith.constant 0 : i32
    %c0_i32_0 = arith.constant 0 : i32
    return %arg0, %arg1, %arg2, %c0_i32 : i32, i32, i32, i32
  }
}

</mosaic_0001>

<llo_original>
// kernel: mul.9
$region0: #{mul.9}
  #allocation0 [shape = 's32[1]{0}', space=sflag, size = 0x4, scoped, tag = 'scoped memory for mul.9']
  %s0 = inlined_call_operand.vmem [shape: f32[1,96], index: 0, kind: input, shape index: {}]
  %s1 = inlined_call_operand.vmem [shape: f32[1,96], index: 1, kind: input, shape index: {}]
  %s2 = inlined_call_operand.vmem [shape: f32[1,96], index: 2, kind: output, shape index: {}]
  %v3 = vld [vmem:[%s0] sm:$0x1]
  %v4 = vld [vmem:[%s1] sm:$0x1]
  %5 = xla_tuple %v3, %v4
  %6 = xla_tuple %5
  %v7 = vmul.f32 %v3, %v4
  %8 = xla_tuple %v7
  %9 = vst [vmem:[%s2] sm:$0x1] %v7

// kernel: _causal_self_attention.5
$region0: #{_causal_self_attention.5}
  #allocation0 [shape = 'u32[]', space=smem, size = 0x4, offset = 0x4, fixed_abs, tag = 'smem constant byte address 0x4 - core index']
  #allocation1 [shape = 'u32[144,128]{1,0:T(1,128)}', space=vmem, size = 0x12000, scoped, tag = 'internal scratch']
  %s0 = inlined_call_operand.vmem [shape: f32[16,32], index: 0, kind: input, shape index: {}]
  %s1 = inlined_call_operand.vmem [shape: f32[32,32], index: 1, kind: input, shape index: {}]
  %s2 = inlined_call_operand.vmem [shape: f32[1,32], index: 2, kind: input, shape index: {}]
  %s3 = inlined_call_operand.hbm [shape: f32[16,32], index: 3, kind: output, shape index: {}]
  %s4 = sld [smem:[#allocation0]]
  $region22: #{_causal_self_attention.5} parent=0
    _
  %s6 = ssub.s32 1, %s4
  %s7 = scalar_select 0, %s6, %s4
  $region1: #{_causal_self_attention.5} parent=0
    #allocation2 [shape = 'u8[8192]{0}', space=vmem, size = 0x2000, scoped, tag = 'output window, operand 0, single buffered']
    #allocation3 [shape = 's32[1]{0}', space=sflag, size = 0x4, scoped, tag = 'scoped memory for _causal_self_attention.5']
    %8 = vsyncpa [#allocation3], 0
    // Predicated region
    $region2: #{_causal_self_attention.5} parent=1 // pred_check
      _
    $region3: #{_causal_self_attention.5} parent=1 // pred_check_branch
      %10 = sbr.rel (0) target = $region5
    $region4: #{_causal_self_attention.5} parent=1 // pred_region
      _
    $region5: #{_causal_self_attention.5} parent=1 // pred_fallthru
      _
    // Predicated region
    $region6: #{_causal_self_attention.5} parent=1 // pred_check
      _
    $region7: #{_causal_self_attention.5} parent=1 // pred_check_branch
      %12 = sbr.rel (0) target = $region9
    $region8: #{_causal_self_attention.5} parent=1 // pred_region
      _
    $region9: #{_causal_self_attention.5} parent=1 // pred_fallthru
      _
    // Predicated region
    $region10: #{_causal_self_attention.5} parent=1 // pred_check
      _
    $region11: #{_causal_self_attention.5} parent=1 // pred_check_branch
      %14 = sbr.rel (0) target = $region13
    $region12: #{_causal_self_attention.5} parent=1 // pred_region
      _
    $region13: #{_causal_self_attention.5} parent=1 // pred_fallthru
      _
    %v15 = vld [vmem:[%s0] sm:$0xff]
    %v16 = vld [vmem:[%s0 + $0x8] sm:$0xff]
    %v17 = vld [vmem:[%s1] sm:$0xff]
    %v18 = vld [vmem:[%s1 + $0x8] sm:$0xff]
    %v19 = vld [vmem:[%s1 + $0x10] sm:$0xff]
    %v20 = vld [vmem:[%s1 + $0x18] sm:$0xff]
    %v21 = vld [vmem:[%s2] sm:$0x1]
    %v23 = vlaneseq
    %v24 = vshrl.u32 %v23, 7
    %v25 = vsub.s32 0, %v24
    %v26 = vrot.slane %v21, %v25
    %vm28 = vcmask 261120
    %v30 = vsel %vm28, %v15, 0
    %v33 = vsel %vm28, %v16, 0
    %35 = vmatprep.subr.mxu0 0.0
    %36 = vmatpush1.msra.mxu0 0.0
    %37 = vmatprep.subr.mxu0 0.0
    %38 = vmatpush1.msra.mxu0 0.0
    %39 = vmatprep.subr.mxu0 0.0
    %40 = vmatpush1.msra.mxu0 0.0
    %41 = vmatprep.subr.mxu0 0.0
    %42 = vmatpush1.msra.mxu0 0.0
    %43 = vmatprep.subr.mxu0 0.0
    %44 = vmatpush1.msra.mxu0 0.0
    %45 = vmatprep.subr.mxu0 0.0
    %46 = vmatpush1.msra.mxu0 0.0
    %47 = vmatprep.subr.mxu0 0.0
    %48 = vmatpush1.msra.mxu0 0.0
    %49 = vmatprep.subr.mxu0 0.0
    %50 = vmatpush1.msra.mxu0 0.0
    %51 = vmatprep.subr.mxu0 0.0
    %52 = vmatpush1.msra.mxu0 0.0
    %53 = vmatprep.subr.mxu0 0.0
    %54 = vmatpush1.msra.mxu0 0.0
    %55 = vmatprep.subr.mxu0 0.0
    %56 = vmatpush1.msra.mxu0 0.0
    %57 = vmatprep.subr.mxu0 0.0
    %58 = vmatpush1.msra.mxu0 0.0
    %59 = vmatprep.subr.mxu0 0.0
    %60 = vmatpush1.msra.mxu0 %v20
    %61 = vmatprep.subr.mxu0 0.0
    %62 = vmatpush1.msra.mxu0 %v19
    %63 = vmatprep.subr.mxu0 0.0
    %64 = vmatpush1.msra.mxu0 %v18
    %65 = vmatprep.subr.mxu0 0.0
    %66 = vmatpush1.msra.mxu0 %v17
    %67 = vmatprep.subr.mxu0 0.0
    %68 = vmatpush2.msra.mxu0 0.0
    %69 = vmatprep.subr.mxu0 0.0
    %70 = vmatpush2.msra.mxu0 0.0
    %71 = vmatprep.subr.mxu0 0.0
    %72 = vmatpush2.msra.mxu0 0.0
    %73 = vmatprep.subr.mxu0 0.0
    %74 = vmatpush2.msra.mxu0 0.0
    %75 = vmatprep.subr.mxu0 0.0
    %76 = vmatpush2.msra.mxu0 0.0
    %77 = vmatprep.subr.mxu0 0.0
    %78 = vmatpush2.msra.mxu0 0.0
    %79 = vmatprep.subr.mxu0 0.0
    %80 = vmatpush2.msra.mxu0 0.0
    %81 = vmatprep.subr.mxu0 0.0
    %82 = vmatpush2.msra.mxu0 0.0
    %83 = vmatprep.subr.mxu0 0.0
    %84 = vmatpush2.msra.mxu0 0.0
    %85 = vmatprep.subr.mxu0 0.0
    %86 = vmatpush2.msra.mxu0 0.0
    %87 = vmatprep.subr.mxu0 0.0
    %88 = vmatpush2.msra.mxu0 0.0
    %89 = vmatprep.subr.mxu0 0.0
    %90 = vmatpush2.msra.mxu0 0.0
    %91 = vmatprep.subr.mxu0 0.0
    %92 = vmatpush2.msra.mxu0 0.0
    %93 = vmatprep.subr.mxu0 0.0
    %94 = vmatpush2.msra.mxu0 0.0
    %95 = vmatprep.subr.mxu0 0.0
    %96 = vmatpush2.msra.mxu0 0.0
    %97 = vmatprep.subr.mxu0 0.0
    %98 = vmatpush2.msra.mxu0 0.0
    %99 = vmatprep.mubr.f32.mxu0 0.0
    %100 = vmatmul.mubr.f32.gmra.mxu0 %v30
    %v101 = vpop.f32.mrf.mxu0
    %v102 = vadd.f32 %v26, %v101
    %v103 = vpop.f32.mrf.mxu0
    %104 = vmatprep.mubr.f32.mxu0 0.0
    %105 = vmatmul.mubr.f32.gmra.mxu0 %v33
    %v106 = vpop.f32.mrf.mxu0
    %v107 = vadd.f32 %v26, %v106
    %v108 = vpop.f32.mrf.mxu0
    %109 = vdwg.mxu0
    %110 = vst.msk [vmem:[#allocation2] sm:$0xff] %vm28, %v102
    %111 = vst.msk [vmem:[#allocation2 + $0x8] sm:$0xff] %vm28, %v107
    // Predicated region
    $region14: #{_causal_self_attention.5} parent=1 // pred_check
      _
    $region15: #{_causal_self_attention.5} parent=1 // pred_check_branch
      %113 = sbr.rel (0) target = $region17
    $region16: #{_causal_self_attention.5} parent=1 // pred_region
      %s115 = ssub.s32 256, 256
      %116 = vsyncadd [#allocation3], %s115
      %s117 = sshll.u32 [#allocation2], 4
      %s118 = int_to_ptr.vmem [resolvable:$true] %s117
      %123 = dma.vmem_to_hbm [thread:$0]  %s118, 256, %s3, [#allocation3], 128, 128, 8
    $region17: #{_causal_self_attention.5} parent=1 // pred_fallthru
      _
    // Predicated region
    $region18: #{_causal_self_attention.5} parent=1 // pred_check
      _
    $region19: #{_causal_self_attention.5} parent=1 // pred_check_branch
      %125 = sbr.rel (0) target = $region21
    $region20: #{_causal_self_attention.5} parent=1 // pred_region
      %126 = dma.done [#allocation3], 256
    $region21: #{_causal_self_attention.5} parent=1 // pred_fallthru
      _
    %127 = vsyncpa [#allocation3], 1

// kernel: _causal_self_attention.3
$region0: #{_causal_self_attention.3}
  #allocation0 [shape = 'u32[]', space=smem, size = 0x4, offset = 0x4, fixed_abs, tag = 'smem constant byte address 0x4 - core index']
  #allocation1 [shape = 'u32[144,128]{1,0:T(1,128)}', space=vmem, size = 0x12000, scoped, tag = 'internal scratch']
  %s0 = inlined_call_operand.vmem [shape: f32[16,32], index: 0, kind: input, shape index: {}]
  %s1 = inlined_call_operand.vmem [shape: f32[32,96], index: 1, kind: input, shape index: {}]
  %s2 = inlined_call_operand.vmem [shape: f32[1,96], index: 2, kind: input, shape index: {}]
  %s3 = inlined_call_operand.vmem [shape: f32[16,96], index: 3, kind: output, shape index: {}]
  %s4 = sld [smem:[#allocation0]]
  $region22: #{_causal_self_attention.3} parent=0
    _
  %s6 = ssub.s32 1, %s4
  %s7 = scalar_select 0, %s6, %s4
  // Predicated region
  $region2: #{_causal_self_attention.3} parent=0 // pred_check
    _
  $region3: #{_causal_self_attention.3} parent=0 // pred_check_branch
    %9 = sbr.rel (0) target = $region5
  $region4: #{_causal_self_attention.3} parent=0 // pred_region
    _
  $region5: #{_causal_self_attention.3} parent=0 // pred_fallthru
    _
  // Predicated region
  $region6: #{_causal_self_attention.3} parent=0 // pred_check
    _
  $region7: #{_causal_self_attention.3} parent=0 // pred_check_branch
    %11 = sbr.rel (0) target = $region9
  $region8: #{_causal_self_attention.3} parent=0 // pred_region
    _
  $region9: #{_causal_self_attention.3} parent=0 // pred_fallthru
    _
  // Predicated region
  $region10: #{_causal_self_attention.3} parent=0 // pred_check
    _
  $region11: #{_causal_self_attention.3} parent=0 // pred_check_branch
    %13 = sbr.rel (0) target = $region13
  $region12: #{_causal_self_attention.3} parent=0 // pred_region
    _
  $region13: #{_causal_self_attention.3} parent=0 // pred_fallthru
    _
  %v14 = vld [vmem:[%s0] sm:$0xff]
  %v15 = vld [vmem:[%s0 + $0x8] sm:$0xff]
  %v16 = vld [vmem:[%s1] sm:$0xff]
  %v17 = vld [vmem:[%s1 + $0x8] sm:$0xff]
  %v18 = vld [vmem:[%s1 + $0x10] sm:$0xff]
  %v19 = vld [vmem:[%s1 + $0x18] sm:$0xff]
  %v20 = vld [vmem:[%s2] sm:$0x1]
  %v22 = vlaneseq
  %v23 = vshrl.u32 %v22, 7
  %v24 = vsub.s32 0, %v23
  %v25 = vrot.slane %v20, %v24
  %vm27 = vcmask 261120
  %v29 = vsel %vm27, %v14, 0
  %v32 = vsel %vm27, %v15, 0
  %34 = vmatprep.subr.mxu0 0.0
  %35 = vmatpush1.msra.mxu0 0.0
  %36 = vmatprep.subr.mxu0 0.0
  %37 = vmatpush1.msra.mxu0 0.0
  %38 = vmatprep.subr.mxu0 0.0
  %39 = vmatpush1.msra.mxu0 0.0
  %40 = vmatprep.subr.mxu0 0.0
  %41 = vmatpush1.msra.mxu0 0.0
  %42 = vmatprep.subr.mxu0 0.0
  %43 = vmatpush1.msra.mxu0 0.0
  %44 = vmatprep.subr.mxu0 0.0
  %45 = vmatpush1.msra.mxu0 0.0
  %46 = vmatprep.subr.mxu0 0.0
  %47 = vmatpush1.msra.mxu0 0.0
  %48 = vmatprep.subr.mxu0 0.0
  %49 = vmatpush1.msra.mxu0 0.0
  %50 = vmatprep.subr.mxu0 0.0
  %51 = vmatpush1.msra.mxu0 0.0
  %52 = vmatprep.subr.mxu0 0.0
  %53 = vmatpush1.msra.mxu0 0.0
  %54 = vmatprep.subr.mxu0 0.0
  %55 = vmatpush1.msra.mxu0 0.0
  %56 = vmatprep.subr.mxu0 0.0
  %57 = vmatpush1.msra.mxu0 0.0
  %58 = vmatprep.subr.mxu0 0.0
  %59 = vmatpush1.msra.mxu0 %v19
  %60 = vmatprep.subr.mxu0 0.0
  %61 = vmatpush1.msra.mxu0 %v18
  %62 = vmatprep.subr.mxu0 0.0
  %63 = vmatpush1.msra.mxu0 %v17
  %64 = vmatprep.subr.mxu0 0.0
  %65 = vmatpush1.msra.mxu0 %v16
  %66 = vmatprep.subr.mxu0 0.0
  %67 = vmatpush2.msra.mxu0 0.0
  %68 = vmatprep.subr.mxu0 0.0
  %69 = vmatpush2.msra.mxu0 0.0
  %70 = vmatprep.subr.mxu0 0.0
  %71 = vmatpush2.msra.mxu0 0.0
  %72 = vmatprep.subr.mxu0 0.0
  %73 = vmatpush2.msra.mxu0 0.0
  %74 = vmatprep.subr.mxu0 0.0
  %75 = vmatpush2.msra.mxu0 0.0
  %76 = vmatprep.subr.mxu0 0.0
  %77 = vmatpush2.msra.mxu0 0.0
  %78 = vmatprep.subr.mxu0 0.0
  %79 = vmatpush2.msra.mxu0 0.0
  %80 = vmatprep.subr.mxu0 0.0
  %81 = vmatpush2.msra.mxu0 0.0
  %82 = vmatprep.subr.mxu0 0.0
  %83 = vmatpush2.msra.mxu0 0.0
  %84 = vmatprep.subr.mxu0 0.0
  %85 = vmatpush2.msra.mxu0 0.0
  %86 = vmatprep.subr.mxu0 0.0
  %87 = vmatpush2.msra.mxu0 0.0
  %88 = vmatprep.subr.mxu0 0.0
  %89 = vmatpush2.msra.mxu0 0.0
  %90 = vmatprep.subr.mxu0 0.0
  %91 = vmatpush2.msra.mxu0 0.0
  %92 = vmatprep.subr.mxu0 0.0
  %93 = vmatpush2.msra.mxu0 0.0
  %94 = vmatprep.subr.mxu0 0.0
  %95 = vmatpush2.msra.mxu0 0.0
  %96 = vmatprep.subr.mxu0 0.0
  %97 = vmatpush2.msra.mxu0 0.0
  %98 = vmatprep.mubr.f32.mxu0 0.0
  %99 = vmatmul.mubr.f32.gmra.mxu0 %v29
  %v100 = vpop.f32.mrf.mxu0
  %v101 = vadd.f32 %v25, %v100
  %v102 = vpop.f32.mrf.mxu0
  %103 = vmatprep.mubr.f32.mxu0 0.0
  %104 = vmatmul.mubr.f32.gmra.mxu0 %v32
  %v105 = vpop.f32.mrf.mxu0
  %v106 = vadd.f32 %v25, %v105
  %v107 = vpop.f32.mrf.mxu0
  %108 = vdwg.mxu0
  %vm109 = vcmask 785408
  %110 = vst.msk [vmem:[%s3] sm:$0xff] %vm109, %v101
  %111 = vst.msk [vmem:[%s3 + $0x8] sm:$0xff] %vm109, %v106
  // Predicated region
  $region14: #{_causal_self_attention.3} parent=0 // pred_check
    _
  $region15: #{_causal_self_attention.3} parent=0 // pred_check_branch
    %113 = sbr.rel (0) target = $region17
  $region16: #{_causal_self_attention.3} parent=0 // pred_region
    _
  $region17: #{_causal_self_attention.3} parent=0 // pred_fallthru
    _
  // Predicated region
  $region18: #{_causal_self_attention.3} parent=0 // pred_check
    _
  $region19: #{_causal_self_attention.3} parent=0 // pred_check_branch
    %115 = sbr.rel (0) target = $region21
  $region20: #{_causal_self_attention.3} parent=0 // pred_region
    _
  $region21: #{_causal_self_attention.3} parent=0 // pred_fallthru
    _

// kernel: _causal_self_attention.4
$region0: #{_causal_self_attention.4}
  #allocation0 [shape = 'u32[]', space=smem, size = 0x4, offset = 0x4, fixed_abs, tag = 'smem constant byte address 0x4 - core index']
  #allocation1 [shape = 'u32[144,128]{1,0:T(1,128)}', space=vmem, size = 0x12000, scoped, tag = 'internal scratch']
  #allocation2 [shape = 'f32[4,8,1]{2,1,0:T(8,128)}', space=vmem, size = 0x4000, scoped, tag = 'scratch operand']
  #allocation3 [shape = 'f32[4,8,1]{2,1,0:T(8,128)}', space=vmem, size = 0x4000, scoped, tag = 'scratch operand']
  #allocation4 [shape = 'f32[4,8,8]{2,1,0:T(8,128)}', space=vmem, size = 0x4000, scoped, tag = 'scratch operand']
  %s0 = inlined_call_operand.vmem [shape: f32[2,4,8,8], index: 0, kind: input, shape index: {}]
  %s1 = inlined_call_operand.vmem [shape: f32[2,4,8,8], index: 1, kind: input, shape index: {}]
  %s2 = inlined_call_operand.vmem [shape: f32[2,4,8,8], index: 2, kind: input, shape index: {}]
  %s3 = inlined_call_operand.vmem [shape: f32[2,4,8,8], index: 3, kind: output, shape index: {}]
  %s4 = sld [smem:[#allocation0]]
  $region61: #{_causal_self_attention.4} parent=0
    _
  %s6 = ssub.s32 1, %s4
  %s7 = scalar_select 0, %s6, %s4
  loop: start=0, step=1, limit=4
  $region2: #{_causal_self_attention.4} parent=0 // loop_pre_header
    _
  $region3: #{_causal_self_attention.4} parent=0 // loop_header
    %s9 = sphi 0, %s13
    %p10 = scmp.ge.s32.totalorder %s9, 4
    %s16 = sphi 0, %s42
    %s17 = sphi 0, %s38
    %s18 = sphi 0, %s34
    %s19 = sphi 0, %s30
    %s20 = sphi 0, %s16
    %s21 = sphi 0, %s17
    %s22 = sphi 0, %s18
    %s23 = sphi 0, %s19
    %s24 = sphi 0, %s20
    %s25 = sphi 0, %s21
    %s26 = sphi 0, %s22
    %s27 = sphi 0, %s23
    %s49 = sphi 0, %s51
    %s52 = sphi 0, %s49
    %s53 = sphi 0, %s52
    %s69 = sphi 0, %s53
    %s83 = sphi 0, %s85
    %s86 = sphi 0, %s83
    %s87 = sphi 0, %s86
    %s103 = sphi 0, %s87
    %s117 = sphi 0, %s119
    %s120 = sphi 0, %s117
    %s121 = sphi 0, %s120
    %s137 = sphi 0, %s121
    %s147 = sphi 0, %s149
    %s150 = sphi 0, %s147
    %s151 = sphi 0, %s150
    %s167 = sphi 0, %s151
  $region4: #{_causal_self_attention.4} parent=0 // loop_header_branch
    %12 = sbr.rel (%p10) target = $region8
  $region5: #{_causal_self_attention.4} parent=0 // loop_body
    %s14 = ssub.s32 %s9, 1
    %s15 = ssub.s32 %s9, 2
    %s28 = sadd.s32 1, %s19
    %p29 = scmp.ge.s32.totalorder %s28, 1
    %s30 = scalar_select %p29, 0, %s28
    %s31 = sadd.s32 1, %s18
    %s32 = scalar_select %p29, %s31, %s18
    %p33 = scmp.ge.s32.totalorder %s32, 1
    %s34 = scalar_select %p33, 0, %s32
    %s35 = sadd.s32 1, %s17
    %s36 = scalar_select %p33, %s35, %s17
    %p37 = scmp.ge.s32.totalorder %s36, 1
    %s38 = scalar_select %p37, 0, %s36
    %s39 = sadd.s32 1, %s16
    %s40 = scalar_select %p37, %s39, %s16
    %p41 = scmp.ge.s32.totalorder %s40, 2
    %s42 = scalar_select %p41, 0, %s40
    %s43 = ssub.s32 %s16, %s42
    %s44 = ssub.s32 %s17, %s38
    %s45 = sor.u32 %s43, %s44
    %s46 = ssub.s32 %s18, %s34
    %s47 = sor.u32 %s45, %s46
    %p48 = scmp.eq.s32.totalorder %s47, 0
    %s50 = sadd.s32 %s49, 1
    %s51 = scalar_select %p48, %s49, %s50
    %p54 = pneg %p48
    %p55 = scmp.eq.s32.totalorder %s9, 1
    %p56 = por %p54, %p55
    %p57 = scmp.ne.s32.totalorder %s49, %s52
    %p58 = scmp.eq.s32.totalorder %s9, 0
    %p59 = por %p57, %p58
    %p60 = scmp.ne.s32.totalorder %s49, %s52
    %p61 = scmp.eq.s32.totalorder %s14, 1
    %p62 = por %p60, %p61
    %p63 = scmp.ne.s32.totalorder %s52, %s53
    %p64 = scmp.eq.s32.totalorder %s14, 0
    %p65 = por %p63, %p64
    %p66 = scmp.ne.s32.totalorder %s52, %s53
    %p67 = scmp.eq.s32.totalorder %s15, 1
    %p68 = por %p66, %p67
    %p70 = scmp.ne.s32.totalorder %s53, %s69
    %p71 = scmp.eq.s32.totalorder %s15, 0
    %p72 = por %p70, %p71
    %p73 = scmp.lt.s32.totalorder %s19, %s18
    %s74 = scalar_select %p73, %s19, %s18
    %p75 = scmp.lt.s32.totalorder %s30, %s34
    %s76 = scalar_select %p75, %s30, %s34
    %s77 = ssub.s32 %s16, %s42
    %s78 = ssub.s32 %s17, %s38
    %s79 = sor.u32 %s77, %s78
    %s80 = ssub.s32 %s74, %s76
    %s81 = sor.u32 %s79, %s80
    %p82 = scmp.eq.s32.totalorder %s81, 0
    %s84 = sadd.s32 %s83, 1
    %s85 = scalar_select %p82, %s83, %s84
    %p88 = pneg %p82
    %p89 = scmp.eq.s32.totalorder %s9, 1
    %p90 = por %p88, %p89
    %p91 = scmp.ne.s32.totalorder %s83, %s86
    %p92 = scmp.eq.s32.totalorder %s9, 0
    %p93 = por %p91, %p92
    %p94 = scmp.ne.s32.totalorder %s83, %s86
    %p95 = scmp.eq.s32.totalorder %s14, 1
    %p96 = por %p94, %p95
    %p97 = scmp.ne.s32.totalorder %s86, %s87
    %p98 = scmp.eq.s32.totalorder %s14, 0
    %p99 = por %p97, %p98
    %p100 = scmp.ne.s32.totalorder %s86, %s87
    %p101 = scmp.eq.s32.totalorder %s15, 1
    %p102 = por %p100, %p101
    %p104 = scmp.ne.s32.totalorder %s87, %s103
    %p105 = scmp.eq.s32.totalorder %s15, 0
    %p106 = por %p104, %p105
    %p107 = scmp.lt.s32.totalorder %s19, %s18
    %s108 = scalar_select %p107, %s19, %s18
    %p109 = scmp.lt.s32.totalorder %s30, %s34
    %s110 = scalar_select %p109, %s30, %s34
    %s111 = ssub.s32 %s16, %s42
    %s112 = ssub.s32 %s17, %s38
    %s113 = sor.u32 %s111, %s112
    %s114 = ssub.s32 %s108, %s110
    %s115 = sor.u32 %s113, %s114
    %p116 = scmp.eq.s32.totalorder %s115, 0
    %s118 = sadd.s32 %s117, 1
    %s119 = scalar_select %p116, %s117, %s118
    %p122 = pneg %p116
    %p123 = scmp.eq.s32.totalorder %s9, 1
    %p124 = por %p122, %p123
    %p125 = scmp.ne.s32.totalorder %s117, %s120
    %p126 = scmp.eq.s32.totalorder %s9, 0
    %p127 = por %p125, %p126
    %p128 = scmp.ne.s32.totalorder %s117, %s120
    %p129 = scmp.eq.s32.totalorder %s14, 1
    %p130 = por %p128, %p129
    %p131 = scmp.ne.s32.totalorder %s120, %s121
    %p132 = scmp.eq.s32.totalorder %s14, 0
    %p133 = por %p131, %p132
    %p134 = scmp.ne.s32.totalorder %s120, %s121
    %p135 = scmp.eq.s32.totalorder %s15, 1
    %p136 = por %p134, %p135
    %p138 = scmp.ne.s32.totalorder %s121, %s137
    %p139 = scmp.eq.s32.totalorder %s15, 0
    %p140 = por %p138, %p139
    %s141 = ssub.s32 %s16, %s42
    %s142 = ssub.s32 %s17, %s38
    %s143 = sor.u32 %s141, %s142
    %s144 = ssub.s32 %s18, %s34
    %s145 = sor.u32 %s143, %s144
    %p146 = scmp.eq.s32.totalorder %s145, 0
    %s148 = sadd.s32 %s147, 1
    %s149 = scalar_select %p146, %s147, %s148
    %p152 = pneg %p146
    %p153 = scmp.eq.s32.totalorder %s9, 1
    %p154 = por %p152, %p153
    %p155 = scmp.ne.s32.totalorder %s147, %s150
    %p156 = scmp.eq.s32.totalorder %s9, 0
    %p157 = por %p155, %p156
    %p158 = scmp.ne.s32.totalorder %s147, %s150
    %p159 = scmp.eq.s32.totalorder %s14, 1
    %p160 = por %p158, %p159
    %p161 = scmp.ne.s32.totalorder %s150, %s151
    %p162 = scmp.eq.s32.totalorder %s14, 0
    %p163 = por %p161, %p162
    %p164 = scmp.ne.s32.totalorder %s150, %s151
    %p165 = scmp.eq.s32.totalorder %s15, 1
    %p166 = por %p164, %p165
    %p168 = scmp.ne.s32.totalorder %s151, %s167
    %p169 = scmp.eq.s32.totalorder %s15, 0
    %p170 = por %p168, %p169
    %p171 = scmp.le.s32.totalorder 1, %s9
    %p172 = scmp.lt.s32.totalorder %s9, 3
    %p173 = pnand %p171, %p172
    %p174 = pneg %p173
    // Predicated region
    $region9: #{_causal_self_attention.4} parent=5 // pred_check
      _
    $region10: #{_causal_self_attention.4} parent=5 // pred_check_branch
      %176 = sbr.rel (%p173) target = $region12
    $region11: #{_causal_self_attention.4} parent=5 // pred_region
      %s177 = ssub.s32 %s9, 1
    $region12: #{_causal_self_attention.4} parent=5 // pred_fallthru
      _
    %p178 = scmp.lt.s32.totalorder %s9, 2
    // Predicated region
    $region13: #{_causal_self_attention.4} parent=5 // pred_check
      %p179 = pneg %p178
    $region14: #{_causal_self_attention.4} parent=5 // pred_check_branch
      %181 = sbr.rel (%p179) target = $region16
    $region15: #{_causal_self_attention.4} parent=5 // pred_region
      // Predicated region
      $region17: #{_causal_self_attention.4} parent=15 // pred_check
        %p182 = pneg %p59
      $region18: #{_causal_self_attention.4} parent=15 // pred_check_branch
        %184 = sbr.rel (%p182) target = $region20
      $region19: #{_causal_self_attention.4} parent=15 // pred_region
        %s185 = smul.u32 4, %s17
        %p186 = scmp.lt.s32.totalorder %s16, 1
        %s187 = scalar_select %p186, %s16, 1
        %p188 = scmp.lt.s32.totalorder %s185, 3
        %s189 = scalar_select %p188, %s185, 3
        %p190 = scmp.lt.s32.totalorder %s18, 0
        %s191 = scalar_select %p190, %s18, 0
        %s192 = sadd.s32 %s191, %s189
        %s193 = smul.addr %s187, 4
        %s194 = sadd.s32 %s192, %s193
        %s195 = smul.addr %s194, 8
        %s196 = scalar_lea.vmem %s0, %s195
        %s197 = smul.u32 4, %s17
      $region20: #{_causal_self_attention.4} parent=15 // pred_fallthru
        _
      // Predicated region
      $region21: #{_causal_self_attention.4} parent=15 // pred_check
        %p198 = pneg %p93
      $region22: #{_causal_self_attention.4} parent=15 // pred_check_branch
        %200 = sbr.rel (%p198) target = $region24
      $region23: #{_causal_self_attention.4} parent=15 // pred_region
        %p201 = scmp.lt.s32.totalorder %s19, %s18
        %s202 = scalar_select %p201, %s19, %s18
        %s203 = smul.u32 4, %s17
        %p204 = scmp.lt.s32.totalorder %s16, 1
        %s205 = scalar_select %p204, %s16, 1
        %p206 = scmp.lt.s32.totalorder %s203, 3
        %s207 = scalar_select %p206, %s203, 3
        %p208 = scmp.lt.s32.totalorder %s202, 0
        %s209 = scalar_select %p208, %s202, 0
        %s210 = sadd.s32 %s209, %s207
        %s211 = smul.addr %s205, 4
        %s212 = sadd.s32 %s210, %s211
        %s213 = smul.addr %s212, 8
        %s214 = scalar_lea.vmem %s1, %s213
        %p215 = scmp.lt.s32.totalorder %s19, %s18
        %s216 = scalar_select %p215, %s19, %s18
        %s217 = smul.u32 4, %s17
      $region24: #{_causal_self_attention.4} parent=15 // pred_fallthru
        _
      // Predicated region
      $region25: #{_causal_self_attention.4} parent=15 // pred_check
        %p218 = pneg %p127
      $region26: #{_causal_self_attention.4} parent=15 // pred_check_branch
        %220 = sbr.rel (%p218) target = $region28
      $region27: #{_causal_self_attention.4} parent=15 // pred_region
        %p221 = scmp.lt.s32.totalorder %s19, %s18
        %s222 = scalar_select %p221, %s19, %s18
        %s223 = smul.u32 4, %s17
        %p224 = scmp.lt.s32.totalorder %s16, 1
        %s225 = scalar_select %p224, %s16, 1
        %p226 = scmp.lt.s32.totalorder %s223, 3
        %s227 = scalar_select %p226, %s223, 3
        %p228 = scmp.lt.s32.totalorder %s222, 0
        %s229 = scalar_select %p228, %s222, 0
        %s230 = sadd.s32 %s229, %s227
        %s231 = smul.addr %s225, 4
        %s232 = sadd.s32 %s230, %s231
        %s233 = smul.addr %s232, 8
        %s234 = scalar_lea.vmem %s2, %s233
        %p235 = scmp.lt.s32.totalorder %s19, %s18
        %s236 = scalar_select %p235, %s19, %s18
        %s237 = smul.u32 4, %s17
      $region28: #{_causal_self_attention.4} parent=15 // pred_fallthru
        _
    $region16: #{_causal_self_attention.4} parent=5 // pred_fallthru
      _
    %p238 = scmp.le.s32.totalorder 1, %s9
    %p239 = scmp.lt.s32.totalorder %s9, 3
    %p240 = pnand %p238, %p239
    %p241 = pneg %p240
    // Predicated region
    $region29: #{_causal_self_attention.4} parent=5 // pred_check
      _
    $region30: #{_causal_self_attention.4} parent=5 // pred_check_branch
      %243 = sbr.rel (%p240) target = $region32
    $region31: #{_causal_self_attention.4} parent=5 // pred_region
      %s244 = ssub.s32 %s9, 1
      %s245 = smul.u32 4, %s21
      %p246 = scmp.lt.s32.totalorder %s20, 1
      %s247 = scalar_select %p246, %s20, 1
      %p248 = scmp.lt.s32.totalorder %s245, 3
      %s249 = scalar_select %p248, %s245, 3
      %p250 = scmp.lt.s32.totalorder %s22, 0
      %s251 = scalar_select %p250, %s22, 0
      %s252 = sadd.s32 %s251, %s249
      %s253 = smul.addr %s247, 4
      %s254 = sadd.s32 %s252, %s253
      %s255 = smul.addr %s254, 8
      %s256 = scalar_lea.vmem %s0, %s255
      %p257 = pneg %p65
      %p258 = pneg %p62
      %p259 = scmp.lt.s32.totalorder %s23, %s22
      %s260 = scalar_select %p259, %s23, %s22
      %s261 = smul.u32 4, %s21
      %p262 = scmp.lt.s32.totalorder %s20, 1
      %s263 = scalar_select %p262, %s20, 1
      %p264 = scmp.lt.s32.totalorder %s261, 3
      %s265 = scalar_select %p264, %s261, 3
      %p266 = scmp.lt.s32.totalorder %s260, 0
      %s267 = scalar_select %p266, %s260, 0
      %s268 = sadd.s32 %s267, %s265
      %s269 = smul.addr %s263, 4
      %s270 = sadd.s32 %s268, %s269
      %s271 = smul.addr %s270, 8
      %s272 = scalar_lea.vmem %s1, %s271
      %p273 = pneg %p99
      %p274 = pneg %p96
      %p275 = scmp.lt.s32.totalorder %s23, %s22
      %s276 = scalar_select %p275, %s23, %s22
      %s277 = smul.u32 4, %s21
      %p278 = scmp.lt.s32.totalorder %s20, 1
      %s279 = scalar_select %p278, %s20, 1
      %p280 = scmp.lt.s32.totalorder %s277, 3
      %s281 = scalar_select %p280, %s277, 3
      %p282 = scmp.lt.s32.totalorder %s276, 0
      %s283 = scalar_select %p282, %s276, 0
      %s284 = sadd.s32 %s283, %s281
      %s285 = smul.addr %s279, 4
      %s286 = sadd.s32 %s284, %s285
      %s287 = smul.addr %s286, 8
      %s288 = scalar_lea.vmem %s2, %s287
      %p289 = pneg %p133
      %p290 = pneg %p130
      %p291 = pneg %p163
      %p292 = pneg %p160
      %s293 = smul.u32 4, %s21
      %p294 = scmp.lt.s32.totalorder %s20, 1
      %s295 = scalar_select %p294, %s20, 1
      %p296 = scmp.lt.s32.totalorder %s293, 3
      %s297 = scalar_select %p296, %s293, 3
      %p298 = scmp.lt.s32.totalorder %s22, 0
      %s299 = scalar_select %p298, %s22, 0
      %s300 = sadd.s32 %s299, %s297
      %s301 = smul.addr %s295, 4
      %s302 = sadd.s32 %s300, %s301
      %s303 = smul.addr %s302, 8
      %s304 = scalar_lea.vmem %s3, %s303
      %s305 = smul.u32 4, %s21
      %p306 = scmp.lt.s32.totalorder %s20, 1
      %s307 = scalar_select %p306, %s20, 1
      %p308 = scmp.lt.s32.totalorder %s305, 3
      %s309 = scalar_select %p308, %s305, 3
      %p310 = scmp.lt.s32.totalorder %s22, 0
      %s311 = scalar_select %p310, %s22, 0
      %s312 = sadd.s32 %s311, %s309
      %s313 = smul.addr %s307, 4
      %s314 = sadd.s32 %s312, %s313
      %s315 = smul.addr %s314, 8
      %s316 = scalar_lea.vmem %s0, %s315
      %s317 = smul.u32 4, %s21
      %p318 = scmp.lt.s32.totalorder %s23, %s22
      %s319 = scalar_select %p318, %s23, %s22
      %s320 = smul.u32 4, %s21
      %p321 = scmp.lt.s32.totalorder %s20, 1
      %s322 = scalar_select %p321, %s20, 1
      %p323 = scmp.lt.s32.totalorder %s320, 3
      %s324 = scalar_select %p323, %s320, 3
      %p325 = scmp.lt.s32.totalorder %s319, 0
      %s326 = scalar_select %p325, %s319, 0
      %s327 = sadd.s32 %s326, %s324
      %s328 = smul.addr %s322, 4
      %s329 = sadd.s32 %s327, %s328
      %s330 = smul.addr %s329, 8
      %s331 = scalar_lea.vmem %s1, %s330
      %p332 = scmp.lt.s32.totalorder %s23, %s22
      %s333 = scalar_select %p332, %s23, %s22
      %s334 = smul.u32 4, %s21
      %p335 = scmp.lt.s32.totalorder %s23, %s22
      %s336 = scalar_select %p335, %s23, %s22
      %s337 = smul.u32 4, %s21
      %p338 = scmp.lt.s32.totalorder %s20, 1
      %s339 = scalar_select %p338, %s20, 1
      %p340 = scmp.lt.s32.totalorder %s337, 3
      %s341 = scalar_select %p340, %s337, 3
      %p342 = scmp.lt.s32.totalorder %s336, 0
      %s343 = scalar_select %p342, %s336, 0
      %s344 = sadd.s32 %s343, %s341
      %s345 = smul.addr %s339, 4
      %s346 = sadd.s32 %s344, %s345
      %s347 = smul.addr %s346, 8
      %s348 = scalar_lea.vmem %s2, %s347
      %p349 = scmp.lt.s32.totalorder %s23, %s22
      %s350 = scalar_select %p349, %s23, %s22
      %s351 = smul.u32 4, %s21
      %s352 = smul.u32 4, %s21
      %p353 = scmp.lt.s32.totalorder %s20, 1
      %s354 = scalar_select %p353, %s20, 1
      %p355 = scmp.lt.s32.totalorder %s352, 3
      %s356 = scalar_select %p355, %s352, 3
      %p357 = scmp.lt.s32.totalorder %s22, 0
      %s358 = scalar_select %p357, %s22, 0
      %s359 = sadd.s32 %s358, %s356
      %s360 = smul.addr %s354, 4
      %s361 = sadd.s32 %s359, %s360
      %s362 = smul.addr %s361, 8
      %s363 = scalar_lea.vmem %s3, %s362
      %s364 = smul.u32 4, %s21
      %p365 = scmp.eq.s32.totalorder %s23, 0
      // Predicated region
      $region33: #{_causal_self_attention.4} parent=31 // pred_check
        %p366 = pneg %p365
      $region34: #{_causal_self_attention.4} parent=31 // pred_check_branch
        %368 = sbr.rel (%p366) target = $region36
      $region35: #{_causal_self_attention.4} parent=31 // pred_region
        %vm369 = vcmask 7168
        %370 = vst.msk [vmem:[#allocation2] sm:$0xff] %vm369, -inf
        %371 = vst.msk [vmem:[#allocation2 + $0x8] sm:$0xff] %vm369, -inf
        %372 = vst.msk [vmem:[#allocation2 + $0x10] sm:$0xff] %vm369, -inf
        %373 = vst.msk [vmem:[#allocation2 + $0x18] sm:$0xff] %vm369, -inf
        %374 = vst.msk [vmem:[#allocation3] sm:$0xff] %vm369, 0.0
        %375 = vst.msk [vmem:[#allocation3 + $0x8] sm:$0xff] %vm369, 0.0
        %376 = vst.msk [vmem:[#allocation3 + $0x10] sm:$0xff] %vm369, 0.0
        %377 = vst.msk [vmem:[#allocation3 + $0x18] sm:$0xff] %vm369, 0.0
        %vm378 = vcmask 64512
        %379 = vst.msk [vmem:[#allocation4] sm:$0xff] %vm378, 0.0
        %380 = vst.msk [vmem:[#allocation4 + $0x8] sm:$0xff] %vm378, 0.0
        %381 = vst.msk [vmem:[#allocation4 + $0x10] sm:$0xff] %vm378, 0.0
        %382 = vst.msk [vmem:[#allocation4 + $0x18] sm:$0xff] %vm378, 0.0
      $region36: #{_causal_self_attention.4} parent=31 // pred_fallthru
        _
      %s383 = smul.u32 %s22, 8
      %s384 = sadd.s32 %s383, 7
      %s385 = smul.u32 %s23, 8
      %s386 = sadd.s32 %s385, 7
      %p387 = scmp.le.s32.totalorder %s386, %s383
      // Predicated region
      $region37: #{_causal_self_attention.4} parent=31 // pred_check
        %p388 = pneg %p387
      $region38: #{_causal_self_attention.4} parent=31 // pred_check_branch
        %390 = sbr.rel (%p388) target = $region40
      $region39: #{_causal_self_attention.4} parent=31 // pred_region
        %v391 = vld [vmem:[%s316] sm:$0xff]
        %v392 = vld [vmem:[%s316 + $0x8] sm:$0xff]
        %v393 = vld [vmem:[%s316 + $0x10] sm:$0xff]
        %v394 = vld [vmem:[%s316 + $0x18] sm:$0xff]
        %v395 = vld [vmem:[%s331] sm:$0xff]
        %v396 = vld [vmem:[%s331 + $0x8] sm:$0xff]
        %v397 = vld [vmem:[%s331 + $0x10] sm:$0xff]
        %v398 = vld [vmem:[%s331 + $0x18] sm:$0xff]
        %vm399 = vcmask 64512
        %v401 = vsel %vm399, %v391, 0
        %v404 = vsel %vm399, %v395, 0
        %406 = vmatprep.subr.mxu0 0.0
        %407 = vmatpush1.xpose.msra.mxu0 0.0
        %408 = vmatprep.subr.mxu0 0.0
        %409 = vmatpush1.xpose.msra.mxu0 0.0
        %410 = vmatprep.subr.mxu0 0.0
        %411 = vmatpush1.xpose.msra.mxu0 0.0
        %412 = vmatprep.subr.mxu0 0.0
        %413 = vmatpush1.xpose.msra.mxu0 0.0
        %414 = vmatprep.subr.mxu0 0.0
        %415 = vmatpush1.xpose.msra.mxu0 0.0
        %416 = vmatprep.subr.mxu0 0.0
        %417 = vmatpush1.xpose.msra.mxu0 0.0
        %418 = vmatprep.subr.mxu0 0.0
        %419 = vmatpush1.xpose.msra.mxu0 0.0
        %420 = vmatprep.subr.mxu0 0.0
        %421 = vmatpush1.xpose.msra.mxu0 0.0
        %422 = vmatprep.subr.mxu0 0.0
        %423 = vmatpush1.xpose.msra.mxu0 0.0
        %424 = vmatprep.subr.mxu0 0.0
        %425 = vmatpush1.xpose.msra.mxu0 0.0
        %426 = vmatprep.subr.mxu0 0.0
        %427 = vmatpush1.xpose.msra.mxu0 0.0
        %428 = vmatprep.subr.mxu0 0.0
        %429 = vmatpush1.xpose.msra.mxu0 0.0
        %430 = vmatprep.subr.mxu0 0.0
        %431 = vmatpush1.xpose.msra.mxu0 0.0
        %432 = vmatprep.subr.mxu0 0.0
        %433 = vmatpush1.xpose.msra.mxu0 0.0
        %434 = vmatprep.subr.mxu0 0.0
        %435 = vmatpush1.xpose.msra.mxu0 0.0
        %436 = vmatprep.subr.mxu0 0.0
        %437 = vmatpush1.xpose.msra.mxu0 %v404
        %438 = vmatprep.subr.mxu0 0.0
        %439 = vmatpush2.xpose.msra.mxu0 0.0
        %440 = vmatprep.subr.mxu0 0.0
        %441 = vmatpush2.xpose.msra.mxu0 0.0
        %442 = vmatprep.subr.mxu0 0.0
        %443 = vmatpush2.xpose.msra.mxu0 0.0
        %444 = vmatprep.subr.mxu0 0.0
        %445 = vmatpush2.xpose.msra.mxu0 0.0
        %446 = vmatprep.subr.mxu0 0.0
        %447 = vmatpush2.xpose.msra.mxu0 0.0
        %448 = vmatprep.subr.mxu0 0.0
        %449 = vmatpush2.xpose.msra.mxu0 0.0
        %450 = vmatprep.subr.mxu0 0.0
        %451 = vmatpush2.xpose.msra.mxu0 0.0
        %452 = vmatprep.subr.mxu0 0.0
        %453 = vmatpush2.xpose.msra.mxu0 0.0
        %454 = vmatprep.subr.mxu0 0.0
        %455 = vmatpush2.xpose.msra.mxu0 0.0
        %456 = vmatprep.subr.mxu0 0.0
        %457 = vmatpush2.xpose.msra.mxu0 0.0
        %458 = vmatprep.subr.mxu0 0.0
        %459 = vmatpush2.xpose.msra.mxu0 0.0
        %460 = vmatprep.subr.mxu0 0.0
        %461 = vmatpush2.xpose.msra.mxu0 0.0
        %462 = vmatprep.subr.mxu0 0.0
        %463 = vmatpush2.xpose.msra.mxu0 0.0
        %464 = vmatprep.subr.mxu0 0.0
        %465 = vmatpush2.xpose.msra.mxu0 0.0
        %466 = vmatprep.subr.mxu0 0.0
        %467 = vmatpush2.xpose.msra.mxu0 0.0
        %468 = vmatprep.subr.mxu0 0.0
        %469 = vmatpush2.xpose.msra.mxu0 0.0
        %470 = vmatprep.mubr.f32.mxu0 0.0
        %471 = vmatmul.mubr.f32.gmra.mxu0 %v401
        %v472 = vpop.f32.mrf.mxu0
        %v473 = vadd.f32 0.0, %v472
        %v474 = vpop.f32.mrf.mxu0
        %475 = vdwg.mxu0
        %v477 = vsel %vm399, %v392, 0
        %v480 = vsel %vm399, %v396, 0
        %482 = vmatprep.subr.mxu0 0.0
        %483 = vmatpush1.xpose.msra.mxu0 0.0
        %484 = vmatprep.subr.mxu0 0.0
        %485 = vmatpush1.xpose.msra.mxu0 0.0
        %486 = vmatprep.subr.mxu0 0.0
        %487 = vmatpush1.xpose.msra.mxu0 0.0
        %488 = vmatprep.subr.mxu0 0.0
        %489 = vmatpush1.xpose.msra.mxu0 0.0
        %490 = vmatprep.subr.mxu0 0.0
        %491 = vmatpush1.xpose.msra.mxu0 0.0
        %492 = vmatprep.subr.mxu0 0.0
        %493 = vmatpush1.xpose.msra.mxu0 0.0
        %494 = vmatprep.subr.mxu0 0.0
        %495 = vmatpush1.xpose.msra.mxu0 0.0
        %496 = vmatprep.subr.mxu0 0.0
        %497 = vmatpush1.xpose.msra.mxu0 0.0
        %498 = vmatprep.subr.mxu0 0.0
        %499 = vmatpush1.xpose.msra.mxu0 0.0
        %500 = vmatprep.subr.mxu0 0.0
        %501 = vmatpush1.xpose.msra.mxu0 0.0
        %502 = vmatprep.subr.mxu0 0.0
        %503 = vmatpush1.xpose.msra.mxu0 0.0
        %504 = vmatprep.subr.mxu0 0.0
        %505 = vmatpush1.xpose.msra.mxu0 0.0
        %506 = vmatprep.subr.mxu0 0.0
        %507 = vmatpush1.xpose.msra.mxu0 0.0
        %508 = vmatprep.subr.mxu0 0.0
        %509 = vmatpush1.xpose.msra.mxu0 0.0
        %510 = vmatprep.subr.mxu0 0.0
        %511 = vmatpush1.xpose.msra.mxu0 0.0
        %512 = vmatprep.subr.mxu0 0.0
        %513 = vmatpush1.xpose.msra.mxu0 %v480
        %514 = vmatprep.subr.mxu0 0.0
        %515 = vmatpush2.xpose.msra.mxu0 0.0
        %516 = vmatprep.subr.mxu0 0.0
        %517 = vmatpush2.xpose.msra.mxu0 0.0
        %518 = vmatprep.subr.mxu0 0.0
        %519 = vmatpush2.xpose.msra.mxu0 0.0
        %520 = vmatprep.subr.mxu0 0.0
        %521 = vmatpush2.xpose.msra.mxu0 0.0
        %522 = vmatprep.subr.mxu0 0.0
        %523 = vmatpush2.xpose.msra.mxu0 0.0
        %524 = vmatprep.subr.mxu0 0.0
        %525 = vmatpush2.xpose.msra.mxu0 0.0
        %526 = vmatprep.subr.mxu0 0.0
        %527 = vmatpush2.xpose.msra.mxu0 0.0
        %528 = vmatprep.subr.mxu0 0.0
        %529 = vmatpush2.xpose.msra.mxu0 0.0
        %530 = vmatprep.subr.mxu0 0.0
        %531 = vmatpush2.xpose.msra.mxu0 0.0
        %532 = vmatprep.subr.mxu0 0.0
        %533 = vmatpush2.xpose.msra.mxu0 0.0
        %534 = vmatprep.subr.mxu0 0.0
        %535 = vmatpush2.xpose.msra.mxu0 0.0
        %536 = vmatprep.subr.mxu0 0.0
        %537 = vmatpush2.xpose.msra.mxu0 0.0
        %538 = vmatprep.subr.mxu0 0.0
        %539 = vmatpush2.xpose.msra.mxu0 0.0
        %540 = vmatprep.subr.mxu0 0.0
        %541 = vmatpush2.xpose.msra.mxu0 0.0
        %542 = vmatprep.subr.mxu0 0.0
        %543 = vmatpush2.xpose.msra.mxu0 0.0
        %544 = vmatprep.subr.mxu0 0.0
        %545 = vmatpush2.xpose.msra.mxu0 0.0
        %546 = vmatprep.mubr.f32.mxu0 0.0
        %547 = vmatmul.mubr.f32.gmra.mxu0 %v477
        %v548 = vpop.f32.mrf.mxu0
        %v549 = vadd.f32 0.0, %v548
        %v550 = vpop.f32.mrf.mxu0
        %551 = vdwg.mxu0
        %v553 = vsel %vm399, %v393, 0
        %v556 = vsel %vm399, %v397, 0
        %558 = vmatprep.subr.mxu0 0.0
        %559 = vmatpush1.xpose.msra.mxu0 0.0
        %560 = vmatprep.subr.mxu0 0.0
        %561 = vmatpush1.xpose.msra.mxu0 0.0
        %562 = vmatprep.subr.mxu0 0.0
        %563 = vmatpush1.xpose.msra.mxu0 0.0
        %564 = vmatprep.subr.mxu0 0.0
        %565 = vmatpush1.xpose.msra.mxu0 0.0
        %566 = vmatprep.subr.mxu0 0.0
        %567 = vmatpush1.xpose.msra.mxu0 0.0
        %568 = vmatprep.subr.mxu0 0.0
        %569 = vmatpush1.xpose.msra.mxu0 0.0
        %570 = vmatprep.subr.mxu0 0.0
        %571 = vmatpush1.xpose.msra.mxu0 0.0
        %572 = vmatprep.subr.mxu0 0.0
        %573 = vmatpush1.xpose.msra.mxu0 0.0
        %574 = vmatprep.subr.mxu0 0.0
        %575 = vmatpush1.xpose.msra.mxu0 0.0
        %576 = vmatprep.subr.mxu0 0.0
        %577 = vmatpush1.xpose.msra.mxu0 0.0
        %578 = vmatprep.subr.mxu0 0.0
        %579 = vmatpush1.xpose.msra.mxu0 0.0
        %580 = vmatprep.subr.mxu0 0.0
        %581 = vmatpush1.xpose.msra.mxu0 0.0
        %582 = vmatprep.subr.mxu0 0.0
        %583 = vmatpush1.xpose.msra.mxu0 0.0
        %584 = vmatprep.subr.mxu0 0.0
        %585 = vmatpush1.xpose.msra.mxu0 0.0
        %586 = vmatprep.subr.mxu0 0.0
        %587 = vmatpush1.xpose.msra.mxu0 0.0
        %588 = vmatprep.subr.mxu0 0.0
        %589 = vmatpush1.xpose.msra.mxu0 %v556
        %590 = vmatprep.subr.mxu0 0.0
        %591 = vmatpush2.xpose.msra.mxu0 0.0
        %592 = vmatprep.subr.mxu0 0.0
        %593 = vmatpush2.xpose.msra.mxu0 0.0
        %594 = vmatprep.subr.mxu0 0.0
        %595 = vmatpush2.xpose.msra.mxu0 0.0
        %596 = vmatprep.subr.mxu0 0.0
        %597 = vmatpush2.xpose.msra.mxu0 0.0
        %598 = vmatprep.subr.mxu0 0.0
        %599 = vmatpush2.xpose.msra.mxu0 0.0
        %600 = vmatprep.subr.mxu0 0.0
        %601 = vmatpush2.xpose.msra.mxu0 0.0
        %602 = vmatprep.subr.mxu0 0.0
        %603 = vmatpush2.xpose.msra.mxu0 0.0
        %604 = vmatprep.subr.mxu0 0.0
        %605 = vmatpush2.xpose.msra.mxu0 0.0
        %606 = vmatprep.subr.mxu0 0.0
        %607 = vmatpush2.xpose.msra.mxu0 0.0
        %608 = vmatprep.subr.mxu0 0.0
        %609 = vmatpush2.xpose.msra.mxu0 0.0
        %610 = vmatprep.subr.mxu0 0.0
        %611 = vmatpush2.xpose.msra.mxu0 0.0
        %612 = vmatprep.subr.mxu0 0.0
        %613 = vmatpush2.xpose.msra.mxu0 0.0
        %614 = vmatprep.subr.mxu0 0.0
        %615 = vmatpush2.xpose.msra.mxu0 0.0
        %616 = vmatprep.subr.mxu0 0.0
        %617 = vmatpush2.xpose.msra.mxu0 0.0
        %618 = vmatprep.subr.mxu0 0.0
        %619 = vmatpush2.xpose.msra.mxu0 0.0
        %620 = vmatprep.subr.mxu0 0.0
        %621 = vmatpush2.xpose.msra.mxu0 0.0
        %622 = vmatprep.mubr.f32.mxu0 0.0
        %623 = vmatmul.mubr.f32.gmra.mxu0 %v553
        %v624 = vpop.f32.mrf.mxu0
        %v625 = vadd.f32 0.0, %v624
        %v626 = vpop.f32.mrf.mxu0
        %627 = vdwg.mxu0
        %v629 = vsel %vm399, %v394, 0
        %v632 = vsel %vm399, %v398, 0
        %634 = vmatprep.subr.mxu0 0.0
        %635 = vmatpush1.xpose.msra.mxu0 0.0
        %636 = vmatprep.subr.mxu0 0.0
        %637 = vmatpush1.xpose.msra.mxu0 0.0
        %638 = vmatprep.subr.mxu0 0.0
        %639 = vmatpush1.xpose.msra.mxu0 0.0
        %640 = vmatprep.subr.mxu0 0.0
        %641 = vmatpush1.xpose.msra.mxu0 0.0
        %642 = vmatprep.subr.mxu0 0.0
        %643 = vmatpush1.xpose.msra.mxu0 0.0
        %644 = vmatprep.subr.mxu0 0.0
        %645 = vmatpush1.xpose.msra.mxu0 0.0
        %646 = vmatprep.subr.mxu0 0.0
        %647 = vmatpush1.xpose.msra.mxu0 0.0
        %648 = vmatprep.subr.mxu0 0.0
        %649 = vmatpush1.xpose.msra.mxu0 0.0
        %650 = vmatprep.subr.mxu0 0.0
        %651 = vmatpush1.xpose.msra.mxu0 0.0
        %652 = vmatprep.subr.mxu0 0.0
        %653 = vmatpush1.xpose.msra.mxu0 0.0
        %654 = vmatprep.subr.mxu0 0.0
        %655 = vmatpush1.xpose.msra.mxu0 0.0
        %656 = vmatprep.subr.mxu0 0.0
        %657 = vmatpush1.xpose.msra.mxu0 0.0
        %658 = vmatprep.subr.mxu0 0.0
        %659 = vmatpush1.xpose.msra.mxu0 0.0
        %660 = vmatprep.subr.mxu0 0.0
        %661 = vmatpush1.xpose.msra.mxu0 0.0
        %662 = vmatprep.subr.mxu0 0.0
        %663 = vmatpush1.xpose.msra.mxu0 0.0
        %664 = vmatprep.subr.mxu0 0.0
        %665 = vmatpush1.xpose.msra.mxu0 %v632
        %666 = vmatprep.subr.mxu0 0.0
        %667 = vmatpush2.xpose.msra.mxu0 0.0
        %668 = vmatprep.subr.mxu0 0.0
        %669 = vmatpush2.xpose.msra.mxu0 0.0
        %670 = vmatprep.subr.mxu0 0.0
        %671 = vmatpush2.xpose.msra.mxu0 0.0
        %672 = vmatprep.subr.mxu0 0.0
        %673 = vmatpush2.xpose.msra.mxu0 0.0
        %674 = vmatprep.subr.mxu0 0.0
        %675 = vmatpush2.xpose.msra.mxu0 0.0
        %676 = vmatprep.subr.mxu0 0.0
        %677 = vmatpush2.xpose.msra.mxu0 0.0
        %678 = vmatprep.subr.mxu0 0.0
        %679 = vmatpush2.xpose.msra.mxu0 0.0
        %680 = vmatprep.subr.mxu0 0.0
        %681 = vmatpush2.xpose.msra.mxu0 0.0
        %682 = vmatprep.subr.mxu0 0.0
        %683 = vmatpush2.xpose.msra.mxu0 0.0
        %684 = vmatprep.subr.mxu0 0.0
        %685 = vmatpush2.xpose.msra.mxu0 0.0
        %686 = vmatprep.subr.mxu0 0.0
        %687 = vmatpush2.xpose.msra.mxu0 0.0
        %688 = vmatprep.subr.mxu0 0.0
        %689 = vmatpush2.xpose.msra.mxu0 0.0
        %690 = vmatprep.subr.mxu0 0.0
        %691 = vmatpush2.xpose.msra.mxu0 0.0
        %692 = vmatprep.subr.mxu0 0.0
        %693 = vmatpush2.xpose.msra.mxu0 0.0
        %694 = vmatprep.subr.mxu0 0.0
        %695 = vmatpush2.xpose.msra.mxu0 0.0
        %696 = vmatprep.subr.mxu0 0.0
        %697 = vmatpush2.xpose.msra.mxu0 0.0
        %698 = vmatprep.mubr.f32.mxu0 0.0
        %699 = vmatmul.mubr.f32.gmra.mxu0 %v629
        %v700 = vpop.f32.mrf.mxu0
        %v701 = vadd.f32 0.0, %v700
        %v702 = vpop.f32.mrf.mxu0
        %703 = vdwg.mxu0
        %v704 = vld [vmem:[#allocation2] sm:$0xff]
        %v705 = vld [vmem:[#allocation2 + $0x8] sm:$0xff]
        %v706 = vld [vmem:[#allocation2 + $0x10] sm:$0xff]
        %v707 = vld [vmem:[#allocation2 + $0x18] sm:$0xff]
        %v708 = vsel %vm399, %v473, -inf
        %709 = vmax.xlane.f32.xlu0 %v708
        %v710 = vpop.xlane.xlu0 %709
        %v711 = vsel %vm399, %v549, -inf
        %712 = vmax.xlane.f32.xlu0 %v711
        %v713 = vpop.xlane.xlu0 %712
        %v714 = vsel %vm399, %v625, -inf
        %715 = vmax.xlane.f32.xlu0 %v714
        %v716 = vpop.xlane.xlu0 %715
        %v717 = vsel %vm399, %v701, -inf
        %718 = vmax.xlane.f32.xlu0 %v717
        %v719 = vpop.xlane.xlu0 %718
        %v720 = vmax.f32 %v704, %v710
        %v721 = vmax.f32 %v705, %v713
        %v722 = vmax.f32 %v706, %v716
        %v723 = vmax.f32 %v707, %v719
        %v724 = vsub.f32 %v704, %v720
        %v725 = vsub.f32 %v705, %v721
        %v726 = vsub.f32 %v706, %v722
        %v727 = vsub.f32 %v707, %v723
        %v728 = vmul.f32 %v724, 1.442695
        %v729 = vpow.pop %v728
        %v730 = vmul.f32 %v725, 1.442695
        %v731 = vpow.pop %v730
        %v732 = vmul.f32 %v726, 1.442695
        %v733 = vpow.pop %v732
        %v734 = vmul.f32 %v727, 1.442695
        %v735 = vpow.pop %v734
        %737 = vset.pattern.permute.xlu0 0
        %738 = vperm.xlu0 %737, %v720
        %v739 = vpop.permute.xlu0 %738
        %742 = vset.pattern.permute.xlu0 0
        %743 = vperm.xlu0 %742, %v721
        %v744 = vpop.permute.xlu0 %743
        %747 = vset.pattern.permute.xlu0 0
        %748 = vperm.xlu0 %747, %v722
        %v749 = vpop.permute.xlu0 %748
        %752 = vset.pattern.permute.xlu0 0
        %753 = vperm.xlu0 %752, %v723
        %v754 = vpop.permute.xlu0 %753
        %v756 = vsub.f32 %v473, %v739
        %v757 = vsub.f32 %v549, %v744
        %v758 = vsub.f32 %v625, %v749
        %v759 = vsub.f32 %v701, %v754
        %v760 = vmul.f32 %v756, 1.442695
        %v761 = vpow.pop %v760
        %v762 = vmul.f32 %v757, 1.442695
        %v763 = vpow.pop %v762
        %v764 = vmul.f32 %v758, 1.442695
        %v765 = vpow.pop %v764
        %v766 = vmul.f32 %v759, 1.442695
        %v767 = vpow.pop %v766
        %v768 = vld [vmem:[#allocation3] sm:$0xff]
        %v769 = vld [vmem:[#allocation3 + $0x8] sm:$0xff]
        %v770 = vld [vmem:[#allocation3 + $0x10] sm:$0xff]
        %v771 = vld [vmem:[#allocation3 + $0x18] sm:$0xff]
        %v772 = vmul.f32 %v729, %v768
        %v773 = vmul.f32 %v731, %v769
        %v774 = vmul.f32 %v733, %v770
        %v775 = vmul.f32 %v735, %v771
        %v776 = vsel %vm399, %v761, 0.0
        %777 = vadd.xlane.f32.xlu0 %v776
        %v778 = vpop.xlane.xlu0 %777
        %v779 = vsel %vm399, %v763, 0.0
        %780 = vadd.xlane.f32.xlu0 %v779
        %v781 = vpop.xlane.xlu0 %780
        %v782 = vsel %vm399, %v765, 0.0
        %783 = vadd.xlane.f32.xlu0 %v782
        %v784 = vpop.xlane.xlu0 %783
        %v785 = vsel %vm399, %v767, 0.0
        %786 = vadd.xlane.f32.xlu0 %v785
        %v787 = vpop.xlane.xlu0 %786
        %v788 = vadd.f32 %v772, %v778
        %v789 = vadd.f32 %v773, %v781
        %v790 = vadd.f32 %v774, %v784
        %v791 = vadd.f32 %v775, %v787
        %vm792 = vcmask 7168
        %793 = vst.msk [vmem:[#allocation3] sm:$0xff] %vm792, %v788
        %794 = vst.msk [vmem:[#allocation3 + $0x8] sm:$0xff] %vm792, %v789
        %795 = vst.msk [vmem:[#allocation3 + $0x10] sm:$0xff] %vm792, %v790
        %796 = vst.msk [vmem:[#allocation3 + $0x18] sm:$0xff] %vm792, %v791
        %v797 = vld [vmem:[#allocation4] sm:$0xff]
        %v798 = vld [vmem:[#allocation4 + $0x8] sm:$0xff]
        %v799 = vld [vmem:[#allocation4 + $0x10] sm:$0xff]
        %v800 = vld [vmem:[#allocation4 + $0x18] sm:$0xff]
        %802 = vset.pattern.permute.xlu0 0
        %803 = vperm.xlu0 %802, %v729
        %v804 = vpop.permute.xlu0 %803
        %807 = vset.pattern.permute.xlu0 0
        %808 = vperm.xlu0 %807, %v731
        %v809 = vpop.permute.xlu0 %808
        %812 = vset.pattern.permute.xlu0 0
        %813 = vperm.xlu0 %812, %v733
        %v814 = vpop.permute.xlu0 %813
        %817 = vset.pattern.permute.xlu0 0
        %818 = vperm.xlu0 %817, %v735
        %v819 = vpop.permute.xlu0 %818
        %v821 = vmul.f32 %v804, %v797
        %v822 = vmul.f32 %v809, %v798
        %v823 = vmul.f32 %v814, %v799
        %v824 = vmul.f32 %v819, %v800
        %v825 = vld [vmem:[%s348] sm:$0xff]
        %v826 = vld [vmem:[%s348 + $0x8] sm:$0xff]
        %v827 = vld [vmem:[%s348 + $0x10] sm:$0xff]
        %v828 = vld [vmem:[%s348 + $0x18] sm:$0xff]
        %v830 = vsel %vm399, %v761, 0
        %832 = vmatprep.subr.mxu0 0.0
        %833 = vmatpush1.msra.mxu0 0.0
        %834 = vmatprep.subr.mxu0 0.0
        %835 = vmatpush1.msra.mxu0 0.0
        %836 = vmatprep.subr.mxu0 0.0
        %837 = vmatpush1.msra.mxu0 0.0
        %838 = vmatprep.subr.mxu0 0.0
        %839 = vmatpush1.msra.mxu0 0.0
        %840 = vmatprep.subr.mxu0 0.0
        %841 = vmatpush1.msra.mxu0 0.0
        %842 = vmatprep.subr.mxu0 0.0
        %843 = vmatpush1.msra.mxu0 0.0
        %844 = vmatprep.subr.mxu0 0.0
        %845 = vmatpush1.msra.mxu0 0.0
        %846 = vmatprep.subr.mxu0 0.0
        %847 = vmatpush1.msra.mxu0 0.0
        %848 = vmatprep.subr.mxu0 0.0
        %849 = vmatpush1.msra.mxu0 0.0
        %850 = vmatprep.subr.mxu0 0.0
        %851 = vmatpush1.msra.mxu0 0.0
        %852 = vmatprep.subr.mxu0 0.0
        %853 = vmatpush1.msra.mxu0 0.0
        %854 = vmatprep.subr.mxu0 0.0
        %855 = vmatpush1.msra.mxu0 0.0
        %856 = vmatprep.subr.mxu0 0.0
        %857 = vmatpush1.msra.mxu0 0.0
        %858 = vmatprep.subr.mxu0 0.0
        %859 = vmatpush1.msra.mxu0 0.0
        %860 = vmatprep.subr.mxu0 0.0
        %861 = vmatpush1.msra.mxu0 0.0
        %862 = vmatprep.subr.mxu0 0.0
        %863 = vmatpush1.msra.mxu0 %v825
        %864 = vmatprep.subr.mxu0 0.0
        %865 = vmatpush2.msra.mxu0 0.0
        %866 = vmatprep.subr.mxu0 0.0
        %867 = vmatpush2.msra.mxu0 0.0
        %868 = vmatprep.subr.mxu0 0.0
        %869 = vmatpush2.msra.mxu0 0.0
        %870 = vmatprep.subr.mxu0 0.0
        %871 = vmatpush2.msra.mxu0 0.0
        %872 = vmatprep.subr.mxu0 0.0
        %873 = vmatpush2.msra.mxu0 0.0
        %874 = vmatprep.subr.mxu0 0.0
        %875 = vmatpush2.msra.mxu0 0.0
        %876 = vmatprep.subr.mxu0 0.0
        %877 = vmatpush2.msra.mxu0 0.0
        %878 = vmatprep.subr.mxu0 0.0
        %879 = vmatpush2.msra.mxu0 0.0
        %880 = vmatprep.subr.mxu0 0.0
        %881 = vmatpush2.msra.mxu0 0.0
        %882 = vmatprep.subr.mxu0 0.0
        %883 = vmatpush2.msra.mxu0 0.0
        %884 = vmatprep.subr.mxu0 0.0
        %885 = vmatpush2.msra.mxu0 0.0
        %886 = vmatprep.subr.mxu0 0.0
        %887 = vmatpush2.msra.mxu0 0.0
        %888 = vmatprep.subr.mxu0 0.0
        %889 = vmatpush2.msra.mxu0 0.0
        %890 = vmatprep.subr.mxu0 0.0
        %891 = vmatpush2.msra.mxu0 0.0
        %892 = vmatprep.subr.mxu0 0.0
        %893 = vmatpush2.msra.mxu0 0.0
        %894 = vmatprep.subr.mxu0 0.0
        %895 = vmatpush2.msra.mxu0 0.0
        %896 = vmatprep.mubr.f32.mxu0 0.0
        %897 = vmatmul.mubr.f32.gmra.mxu0 %v830
        %v898 = vpop.f32.mrf.mxu0
        %v899 = vadd.f32 0.0, %v898
        %v900 = vpop.f32.mrf.mxu0
        %901 = vdwg.mxu0
        %v903 = vsel %vm399, %v763, 0
        %905 = vmatprep.subr.mxu0 0.0
        %906 = vmatpush1.msra.mxu0 0.0
        %907 = vmatprep.subr.mxu0 0.0
        %908 = vmatpush1.msra.mxu0 0.0
        %909 = vmatprep.subr.mxu0 0.0
        %910 = vmatpush1.msra.mxu0 0.0
        %911 = vmatprep.subr.mxu0 0.0
        %912 = vmatpush1.msra.mxu0 0.0
        %913 = vmatprep.subr.mxu0 0.0
        %914 = vmatpush1.msra.mxu0 0.0
        %915 = vmatprep.subr.mxu0 0.0
        %916 = vmatpush1.msra.mxu0 0.0
        %917 = vmatprep.subr.mxu0 0.0
        %918 = vmatpush1.msra.mxu0 0.0
        %919 = vmatprep.subr.mxu0 0.0
        %920 = vmatpush1.msra.mxu0 0.0
        %921 = vmatprep.subr.mxu0 0.0
        %922 = vmatpush1.msra.mxu0 0.0
        %923 = vmatprep.subr.mxu0 0.0
        %924 = vmatpush1.msra.mxu0 0.0
        %925 = vmatprep.subr.mxu0 0.0
        %926 = vmatpush1.msra.mxu0 0.0
        %927 = vmatprep.subr.mxu0 0.0
        %928 = vmatpush1.msra.mxu0 0.0
        %929 = vmatprep.subr.mxu0 0.0
        %930 = vmatpush1.msra.mxu0 0.0
        %931 = vmatprep.subr.mxu0 0.0
        %932 = vmatpush1.msra.mxu0 0.0
        %933 = vmatprep.subr.mxu0 0.0
        %934 = vmatpush1.msra.mxu0 0.0
        %935 = vmatprep.subr.mxu0 0.0
        %936 = vmatpush1.msra.mxu0 %v826
        %937 = vmatprep.subr.mxu0 0.0
        %938 = vmatpush2.msra.mxu0 0.0
        %939 = vmatprep.subr.mxu0 0.0
        %940 = vmatpush2.msra.mxu0 0.0
        %941 = vmatprep.subr.mxu0 0.0
        %942 = vmatpush2.msra.mxu0 0.0
        %943 = vmatprep.subr.mxu0 0.0
        %944 = vmatpush2.msra.mxu0 0.0
        %945 = vmatprep.subr.mxu0 0.0
        %946 = vmatpush2.msra.mxu0 0.0
        %947 = vmatprep.subr.mxu0 0.0
        %948 = vmatpush2.msra.mxu0 0.0
        %949 = vmatprep.subr.mxu0 0.0
        %950 = vmatpush2.msra.mxu0 0.0
        %951 = vmatprep.subr.mxu0 0.0
        %952 = vmatpush2.msra.mxu0 0.0
        %953 = vmatprep.subr.mxu0 0.0
        %954 = vmatpush2.msra.mxu0 0.0
        %955 = vmatprep.subr.mxu0 0.0
        %956 = vmatpush2.msra.mxu0 0.0
        %957 = vmatprep.subr.mxu0 0.0
        %958 = vmatpush2.msra.mxu0 0.0
        %959 = vmatprep.subr.mxu0 0.0
        %960 = vmatpush2.msra.mxu0 0.0
        %961 = vmatprep.subr.mxu0 0.0
        %962 = vmatpush2.msra.mxu0 0.0
        %963 = vmatprep.subr.mxu0 0.0
        %964 = vmatpush2.msra.mxu0 0.0
        %965 = vmatprep.subr.mxu0 0.0
        %966 = vmatpush2.msra.mxu0 0.0
        %967 = vmatprep.subr.mxu0 0.0
        %968 = vmatpush2.msra.mxu0 0.0
        %969 = vmatprep.mubr.f32.mxu0 0.0
        %970 = vmatmul.mubr.f32.gmra.mxu0 %v903
        %v971 = vpop.f32.mrf.mxu0
        %v972 = vadd.f32 0.0, %v971
        %v973 = vpop.f32.mrf.mxu0
        %974 = vdwg.mxu0
        %v976 = vsel %vm399, %v765, 0
        %978 = vmatprep.subr.mxu0 0.0
        %979 = vmatpush1.msra.mxu0 0.0
        %980 = vmatprep.subr.mxu0 0.0
        %981 = vmatpush1.msra.mxu0 0.0
        %982 = vmatprep.subr.mxu0 0.0
        %983 = vmatpush1.msra.mxu0 0.0
        %984 = vmatprep.subr.mxu0 0.0
        %985 = vmatpush1.msra.mxu0 0.0
        %986 = vmatprep.subr.mxu0 0.0
        %987 = vmatpush1.msra.mxu0 0.0
        %988 = vmatprep.subr.mxu0 0.0
        %989 = vmatpush1.msra.mxu0 0.0
        %990 = vmatprep.subr.mxu0 0.0
        %991 = vmatpush1.msra.mxu0 0.0
        %992 = vmatprep.subr.mxu0 0.0
        %993 = vmatpush1.msra.mxu0 0.0
        %994 = vmatprep.subr.mxu0 0.0
        %995 = vmatpush1.msra.mxu0 0.0
        %996 = vmatprep.subr.mxu0 0.0
        %997 = vmatpush1.msra.mxu0 0.0
        %998 = vmatprep.subr.mxu0 0.0
        %999 = vmatpush1.msra.mxu0 0.0
        %1000 = vmatprep.subr.mxu0 0.0
        %1001 = vmatpush1.msra.mxu0 0.0
        %1002 = vmatprep.subr.mxu0 0.0
        %1003 = vmatpush1.msra.mxu0 0.0
        %1004 = vmatprep.subr.mxu0 0.0
        %1005 = vmatpush1.msra.mxu0 0.0
        %1006 = vmatprep.subr.mxu0 0.0
        %1007 = vmatpush1.msra.mxu0 0.0
        %1008 = vmatprep.subr.mxu0 0.0
        %1009 = vmatpush1.msra.mxu0 %v827
        %1010 = vmatprep.subr.mxu0 0.0
        %1011 = vmatpush2.msra.mxu0 0.0
        %1012 = vmatprep.subr.mxu0 0.0
        %1013 = vmatpush2.msra.mxu0 0.0
        %1014 = vmatprep.subr.mxu0 0.0
        %1015 = vmatpush2.msra.mxu0 0.0
        %1016 = vmatprep.subr.mxu0 0.0
        %1017 = vmatpush2.msra.mxu0 0.0
        %1018 = vmatprep.subr.mxu0 0.0
        %1019 = vmatpush2.msra.mxu0 0.0
        %1020 = vmatprep.subr.mxu0 0.0
        %1021 = vmatpush2.msra.mxu0 0.0
        %1022 = vmatprep.subr.mxu0 0.0
        %1023 = vmatpush2.msra.mxu0 0.0
        %1024 = vmatprep.subr.mxu0 0.0
        %1025 = vmatpush2.msra.mxu0 0.0
        %1026 = vmatprep.subr.mxu0 0.0
        %1027 = vmatpush2.msra.mxu0 0.0
        %1028 = vmatprep.subr.mxu0 0.0
        %1029 = vmatpush2.msra.mxu0 0.0
        %1030 = vmatprep.subr.mxu0 0.0
        %1031 = vmatpush2.msra.mxu0 0.0
        %1032 = vmatprep.subr.mxu0 0.0
        %1033 = vmatpush2.msra.mxu0 0.0
        %1034 = vmatprep.subr.mxu0 0.0
        %1035 = vmatpush2.msra.mxu0 0.0
        %1036 = vmatprep.subr.mxu0 0.0
        %1037 = vmatpush2.msra.mxu0 0.0
        %1038 = vmatprep.subr.mxu0 0.0
        %1039 = vmatpush2.msra.mxu0 0.0
        %1040 = vmatprep.subr.mxu0 0.0
        %1041 = vmatpush2.msra.mxu0 0.0
        %1042 = vmatprep.mubr.f32.mxu0 0.0
        %1043 = vmatmul.mubr.f32.gmra.mxu0 %v976
        %v1044 = vpop.f32.mrf.mxu0
        %v1045 = vadd.f32 0.0, %v1044
        %v1046 = vpop.f32.mrf.mxu0
        %1047 = vdwg.mxu0
        %v1049 = vsel %vm399, %v767, 0
        %1051 = vmatprep.subr.mxu0 0.0
        %1052 = vmatpush1.msra.mxu0 0.0
        %1053 = vmatprep.subr.mxu0 0.0
        %1054 = vmatpush1.msra.mxu0 0.0
        %1055 = vmatprep.subr.mxu0 0.0
        %1056 = vmatpush1.msra.mxu0 0.0
        %1057 = vmatprep.subr.mxu0 0.0
        %1058 = vmatpush1.msra.mxu0 0.0
        %1059 = vmatprep.subr.mxu0 0.0
        %1060 = vmatpush1.msra.mxu0 0.0
        %1061 = vmatprep.subr.mxu0 0.0
        %1062 = vmatpush1.msra.mxu0 0.0
        %1063 = vmatprep.subr.mxu0 0.0
        %1064 = vmatpush1.msra.mxu0 0.0
        %1065 = vmatprep.subr.mxu0 0.0
        %1066 = vmatpush1.msra.mxu0 0.0
        %1067 = vmatprep.subr.mxu0 0.0
        %1068 = vmatpush1.msra.mxu0 0.0
        %1069 = vmatprep.subr.mxu0 0.0
        %1070 = vmatpush1.msra.mxu0 0.0
        %1071 = vmatprep.subr.mxu0 0.0
        %1072 = vmatpush1.msra.mxu0 0.0
        %1073 = vmatprep.subr.mxu0 0.0
        %1074 = vmatpush1.msra.mxu0 0.0
        %1075 = vmatprep.subr.mxu0 0.0
        %1076 = vmatpush1.msra.mxu0 0.0
        %1077 = vmatprep.subr.mxu0 0.0
        %1078 = vmatpush1.msra.mxu0 0.0
        %1079 = vmatprep.subr.mxu0 0.0
        %1080 = vmatpush1.msra.mxu0 0.0
        %1081 = vmatprep.subr.mxu0 0.0
        %1082 = vmatpush1.msra.mxu0 %v828
        %1083 = vmatprep.subr.mxu0 0.0
        %1084 = vmatpush2.msra.mxu0 0.0
        %1085 = vmatprep.subr.mxu0 0.0
        %1086 = vmatpush2.msra.mxu0 0.0
        %1087 = vmatprep.subr.mxu0 0.0
        %1088 = vmatpush2.msra.mxu0 0.0
        %1089 = vmatprep.subr.mxu0 0.0
        %1090 = vmatpush2.msra.mxu0 0.0
        %1091 = vmatprep.subr.mxu0 0.0
        %1092 = vmatpush2.msra.mxu0 0.0
        %1093 = vmatprep.subr.mxu0 0.0
        %1094 = vmatpush2.msra.mxu0 0.0
        %1095 = vmatprep.subr.mxu0 0.0
        %1096 = vmatpush2.msra.mxu0 0.0
        %1097 = vmatprep.subr.mxu0 0.0
        %1098 = vmatpush2.msra.mxu0 0.0
        %1099 = vmatprep.subr.mxu0 0.0
        %1100 = vmatpush2.msra.mxu0 0.0
        %1101 = vmatprep.subr.mxu0 0.0
        %1102 = vmatpush2.msra.mxu0 0.0
        %1103 = vmatprep.subr.mxu0 0.0
        %1104 = vmatpush2.msra.mxu0 0.0
        %1105 = vmatprep.subr.mxu0 0.0
        %1106 = vmatpush2.msra.mxu0 0.0
        %1107 = vmatprep.subr.mxu0 0.0
        %1108 = vmatpush2.msra.mxu0 0.0
        %1109 = vmatprep.subr.mxu0 0.0
        %1110 = vmatpush2.msra.mxu0 0.0
        %1111 = vmatprep.subr.mxu0 0.0
        %1112 = vmatpush2.msra.mxu0 0.0
        %1113 = vmatprep.subr.mxu0 0.0
        %1114 = vmatpush2.msra.mxu0 0.0
        %1115 = vmatprep.mubr.f32.mxu0 0.0
        %1116 = vmatmul.mubr.f32.gmra.mxu0 %v1049
        %v1117 = vpop.f32.mrf.mxu0
        %v1118 = vadd.f32 0.0, %v1117
        %v1119 = vpop.f32.mrf.mxu0
        %1120 = vdwg.mxu0
        %v1121 = vadd.f32 %v821, %v899
        %v1122 = vadd.f32 %v822, %v972
        %v1123 = vadd.f32 %v823, %v1045
        %v1124 = vadd.f32 %v824, %v1118
        %1125 = vst.msk [vmem:[#allocation4] sm:$0xff] %vm399, %v1121
        %1126 = vst.msk [vmem:[#allocation4 + $0x8] sm:$0xff] %vm399, %v1122
        %1127 = vst.msk [vmem:[#allocation4 + $0x10] sm:$0xff] %vm399, %v1123
        %1128 = vst.msk [vmem:[#allocation4 + $0x18] sm:$0xff] %vm399, %v1124
        %1129 = vst.msk [vmem:[#allocation2] sm:$0xff] %vm792, %v720
        %1130 = vst.msk [vmem:[#allocation2 + $0x8] sm:$0xff] %vm792, %v721
        %1131 = vst.msk [vmem:[#allocation2 + $0x10] sm:$0xff] %vm792, %v722
        %1132 = vst.msk [vmem:[#allocation2 + $0x18] sm:$0xff] %vm792, %v723
      $region40: #{_causal_self_attention.4} parent=31 // pred_fallthru
        _
      %p1133 = scmp.gt.s32.totalorder %s386, %s383
      %p1134 = scmp.le.s32.totalorder %s385, %s384
      %p1135 = pnand %p1133, %p1134
      %p1136 = pneg %p1135
      // Predicated region
      $region41: #{_causal_self_attention.4} parent=31 // pred_check
        _
      $region42: #{_causal_self_attention.4} parent=31 // pred_check_branch
        %1138 = sbr.rel (%p1135) target = $region44
      $region43: #{_causal_self_attention.4} parent=31 // pred_region
        %v1139 = vld [vmem:[%s316] sm:$0xff]
        %v1140 = vld [vmem:[%s316 + $0x8] sm:$0xff]
        %v1141 = vld [vmem:[%s316 + $0x10] sm:$0xff]
        %v1142 = vld [vmem:[%s316 + $0x18] sm:$0xff]
        %v1143 = vld [vmem:[%s331] sm:$0xff]
        %v1144 = vld [vmem:[%s331 + $0x8] sm:$0xff]
        %v1145 = vld [vmem:[%s331 + $0x10] sm:$0xff]
        %v1146 = vld [vmem:[%s331 + $0x18] sm:$0xff]
        %vm1147 = vcmask 64512
        %v1149 = vsel %vm1147, %v1139, 0
        %v1152 = vsel %vm1147, %v1143, 0
        %1154 = vmatprep.subr.mxu0 0.0
        %1155 = vmatpush1.xpose.msra.mxu0 0.0
        %1156 = vmatprep.subr.mxu0 0.0
        %1157 = vmatpush1.xpose.msra.mxu0 0.0
        %1158 = vmatprep.subr.mxu0 0.0
        %1159 = vmatpush1.xpose.msra.mxu0 0.0
        %1160 = vmatprep.subr.mxu0 0.0
        %1161 = vmatpush1.xpose.msra.mxu0 0.0
        %1162 = vmatprep.subr.mxu0 0.0
        %1163 = vmatpush1.xpose.msra.mxu0 0.0
        %1164 = vmatprep.subr.mxu0 0.0
        %1165 = vmatpush1.xpose.msra.mxu0 0.0
        %1166 = vmatprep.subr.mxu0 0.0
        %1167 = vmatpush1.xpose.msra.mxu0 0.0
        %1168 = vmatprep.subr.mxu0 0.0
        %1169 = vmatpush1.xpose.msra.mxu0 0.0
        %1170 = vmatprep.subr.mxu0 0.0
        %1171 = vmatpush1.xpose.msra.mxu0 0.0
        %1172 = vmatprep.subr.mxu0 0.0
        %1173 = vmatpush1.xpose.msra.mxu0 0.0
        %1174 = vmatprep.subr.mxu0 0.0
        %1175 = vmatpush1.xpose.msra.mxu0 0.0
        %1176 = vmatprep.subr.mxu0 0.0
        %1177 = vmatpush1.xpose.msra.mxu0 0.0
        %1178 = vmatprep.subr.mxu0 0.0
        %1179 = vmatpush1.xpose.msra.mxu0 0.0
        %1180 = vmatprep.subr.mxu0 0.0
        %1181 = vmatpush1.xpose.msra.mxu0 0.0
        %1182 = vmatprep.subr.mxu0 0.0
        %1183 = vmatpush1.xpose.msra.mxu0 0.0
        %1184 = vmatprep.subr.mxu0 0.0
        %1185 = vmatpush1.xpose.msra.mxu0 %v1152
        %1186 = vmatprep.subr.mxu0 0.0
        %1187 = vmatpush2.xpose.msra.mxu0 0.0
        %1188 = vmatprep.subr.mxu0 0.0
        %1189 = vmatpush2.xpose.msra.mxu0 0.0
        %1190 = vmatprep.subr.mxu0 0.0
        %1191 = vmatpush2.xpose.msra.mxu0 0.0
        %1192 = vmatprep.subr.mxu0 0.0
        %1193 = vmatpush2.xpose.msra.mxu0 0.0
        %1194 = vmatprep.subr.mxu0 0.0
        %1195 = vmatpush2.xpose.msra.mxu0 0.0
        %1196 = vmatprep.subr.mxu0 0.0
        %1197 = vmatpush2.xpose.msra.mxu0 0.0
        %1198 = vmatprep.subr.mxu0 0.0
        %1199 = vmatpush2.xpose.msra.mxu0 0.0
        %1200 = vmatprep.subr.mxu0 0.0
        %1201 = vmatpush2.xpose.msra.mxu0 0.0
        %1202 = vmatprep.subr.mxu0 0.0
        %1203 = vmatpush2.xpose.msra.mxu0 0.0
        %1204 = vmatprep.subr.mxu0 0.0
        %1205 = vmatpush2.xpose.msra.mxu0 0.0
        %1206 = vmatprep.subr.mxu0 0.0
        %1207 = vmatpush2.xpose.msra.mxu0 0.0
        %1208 = vmatprep.subr.mxu0 0.0
        %1209 = vmatpush2.xpose.msra.mxu0 0.0
        %1210 = vmatprep.subr.mxu0 0.0
        %1211 = vmatpush2.xpose.msra.mxu0 0.0
        %1212 = vmatprep.subr.mxu0 0.0
        %1213 = vmatpush2.xpose.msra.mxu0 0.0
        %1214 = vmatprep.subr.mxu0 0.0
        %1215 = vmatpush2.xpose.msra.mxu0 0.0
        %1216 = vmatprep.subr.mxu0 0.0
        %1217 = vmatpush2.xpose.msra.mxu0 0.0
        %1218 = vmatprep.mubr.f32.mxu0 0.0
        %1219 = vmatmul.mubr.f32.gmra.mxu0 %v1149
        %v1220 = vpop.f32.mrf.mxu0
        %v1221 = vadd.f32 0.0, %v1220
        %v1222 = vpop.f32.mrf.mxu0
        %1223 = vdwg.mxu0
        %v1225 = vsel %vm1147, %v1140, 0
        %v1228 = vsel %vm1147, %v1144, 0
        %1230 = vmatprep.subr.mxu0 0.0
        %1231 = vmatpush1.xpose.msra.mxu0 0.0
        %1232 = vmatprep.subr.mxu0 0.0
        %1233 = vmatpush1.xpose.msra.mxu0 0.0
        %1234 = vmatprep.subr.mxu0 0.0
        %1235 = vmatpush1.xpose.msra.mxu0 0.0
        %1236 = vmatprep.subr.mxu0 0.0
        %1237 = vmatpush1.xpose.msra.mxu0 0.0
        %1238 = vmatprep.subr.mxu0 0.0
        %1239 = vmatpush1.xpose.msra.mxu0 0.0
        %1240 = vmatprep.subr.mxu0 0.0
        %1241 = vmatpush1.xpose.msra.mxu0 0.0
        %1242 = vmatprep.subr.mxu0 0.0
        %1243 = vmatpush1.xpose.msra.mxu0 0.0
        %1244 = vmatprep.subr.mxu0 0.0
        %1245 = vmatpush1.xpose.msra.mxu0 0.0
        %1246 = vmatprep.subr.mxu0 0.0
        %1247 = vmatpush1.xpose.msra.mxu0 0.0
        %1248 = vmatprep.subr.mxu0 0.0
        %1249 = vmatpush1.xpose.msra.mxu0 0.0
        %1250 = vmatprep.subr.mxu0 0.0
        %1251 = vmatpush1.xpose.msra.mxu0 0.0
        %1252 = vmatprep.subr.mxu0 0.0
        %1253 = vmatpush1.xpose.msra.mxu0 0.0
        %1254 = vmatprep.subr.mxu0 0.0
        %1255 = vmatpush1.xpose.msra.mxu0 0.0
        %1256 = vmatprep.subr.mxu0 0.0
        %1257 = vmatpush1.xpose.msra.mxu0 0.0
        %1258 = vmatprep.subr.mxu0 0.0
        %1259 = vmatpush1.xpose.msra.mxu0 0.0
        %1260 = vmatprep.subr.mxu0 0.0
        %1261 = vmatpush1.xpose.msra.mxu0 %v1228
        %1262 = vmatprep.subr.mxu0 0.0
        %1263 = vmatpush2.xpose.msra.mxu0 0.0
        %1264 = vmatprep.subr.mxu0 0.0
        %1265 = vmatpush2.xpose.msra.mxu0 0.0
        %1266 = vmatprep.subr.mxu0 0.0
        %1267 = vmatpush2.xpose.msra.mxu0 0.0
        %1268 = vmatprep.subr.mxu0 0.0
        %1269 = vmatpush2.xpose.msra.mxu0 0.0
        %1270 = vmatprep.subr.mxu0 0.0
        %1271 = vmatpush2.xpose.msra.mxu0 0.0
        %1272 = vmatprep.subr.mxu0 0.0
        %1273 = vmatpush2.xpose.msra.mxu0 0.0
        %1274 = vmatprep.subr.mxu0 0.0
        %1275 = vmatpush2.xpose.msra.mxu0 0.0
        %1276 = vmatprep.subr.mxu0 0.0
        %1277 = vmatpush2.xpose.msra.mxu0 0.0
        %1278 = vmatprep.subr.mxu0 0.0
        %1279 = vmatpush2.xpose.msra.mxu0 0.0
        %1280 = vmatprep.subr.mxu0 0.0
        %1281 = vmatpush2.xpose.msra.mxu0 0.0
        %1282 = vmatprep.subr.mxu0 0.0
        %1283 = vmatpush2.xpose.msra.mxu0 0.0
        %1284 = vmatprep.subr.mxu0 0.0
        %1285 = vmatpush2.xpose.msra.mxu0 0.0
        %1286 = vmatprep.subr.mxu0 0.0
        %1287 = vmatpush2.xpose.msra.mxu0 0.0
        %1288 = vmatprep.subr.mxu0 0.0
        %1289 = vmatpush2.xpose.msra.mxu0 0.0
        %1290 = vmatprep.subr.mxu0 0.0
        %1291 = vmatpush2.xpose.msra.mxu0 0.0
        %1292 = vmatprep.subr.mxu0 0.0
        %1293 = vmatpush2.xpose.msra.mxu0 0.0
        %1294 = vmatprep.mubr.f32.mxu0 0.0
        %1295 = vmatmul.mubr.f32.gmra.mxu0 %v1225
        %v1296 = vpop.f32.mrf.mxu0
        %v1297 = vadd.f32 0.0, %v1296
        %v1298 = vpop.f32.mrf.mxu0
        %1299 = vdwg.mxu0
        %v1301 = vsel %vm1147, %v1141, 0
        %v1304 = vsel %vm1147, %v1145, 0
        %1306 = vmatprep.subr.mxu0 0.0
        %1307 = vmatpush1.xpose.msra.mxu0 0.0
        %1308 = vmatprep.subr.mxu0 0.0
        %1309 = vmatpush1.xpose.msra.mxu0 0.0
        %1310 = vmatprep.subr.mxu0 0.0
        %1311 = vmatpush1.xpose.msra.mxu0 0.0
        %1312 = vmatprep.subr.mxu0 0.0
        %1313 = vmatpush1.xpose.msra.mxu0 0.0
        %1314 = vmatprep.subr.mxu0 0.0
        %1315 = vmatpush1.xpose.msra.mxu0 0.0
        %1316 = vmatprep.subr.mxu0 0.0
        %1317 = vmatpush1.xpose.msra.mxu0 0.0
        %1318 = vmatprep.subr.mxu0 0.0
        %1319 = vmatpush1.xpose.msra.mxu0 0.0
        %1320 = vmatprep.subr.mxu0 0.0
        %1321 = vmatpush1.xpose.msra.mxu0 0.0
        %1322 = vmatprep.subr.mxu0 0.0
        %1323 = vmatpush1.xpose.msra.mxu0 0.0
        %1324 = vmatprep.subr.mxu0 0.0
        %1325 = vmatpush1.xpose.msra.mxu0 0.0
        %1326 = vmatprep.subr.mxu0 0.0
        %1327 = vmatpush1.xpose.msra.mxu0 0.0
        %1328 = vmatprep.subr.mxu0 0.0
        %1329 = vmatpush1.xpose.msra.mxu0 0.0
        %1330 = vmatprep.subr.mxu0 0.0
        %1331 = vmatpush1.xpose.msra.mxu0 0.0
        %1332 = vmatprep.subr.mxu0 0.0
        %1333 = vmatpush1.xpose.msra.mxu0 0.0
        %1334 = vmatprep.subr.mxu0 0.0
        %1335 = vmatpush1.xpose.msra.mxu0 0.0
        %1336 = vmatprep.subr.mxu0 0.0
        %1337 = vmatpush1.xpose.msra.mxu0 %v1304
        %1338 = vmatprep.subr.mxu0 0.0
        %1339 = vmatpush2.xpose.msra.mxu0 0.0
        %1340 = vmatprep.subr.mxu0 0.0
        %1341 = vmatpush2.xpose.msra.mxu0 0.0
        %1342 = vmatprep.subr.mxu0 0.0
        %1343 = vmatpush2.xpose.msra.mxu0 0.0
        %1344 = vmatprep.subr.mxu0 0.0
        %1345 = vmatpush2.xpose.msra.mxu0 0.0
        %1346 = vmatprep.subr.mxu0 0.0
        %1347 = vmatpush2.xpose.msra.mxu0 0.0
        %1348 = vmatprep.subr.mxu0 0.0
        %1349 = vmatpush2.xpose.msra.mxu0 0.0
        %1350 = vmatprep.subr.mxu0 0.0
        %1351 = vmatpush2.xpose.msra.mxu0 0.0
        %1352 = vmatprep.subr.mxu0 0.0
        %1353 = vmatpush2.xpose.msra.mxu0 0.0
        %1354 = vmatprep.subr.mxu0 0.0
        %1355 = vmatpush2.xpose.msra.mxu0 0.0
        %1356 = vmatprep.subr.mxu0 0.0
        %1357 = vmatpush2.xpose.msra.mxu0 0.0
        %1358 = vmatprep.subr.mxu0 0.0
        %1359 = vmatpush2.xpose.msra.mxu0 0.0
        %1360 = vmatprep.subr.mxu0 0.0
        %1361 = vmatpush2.xpose.msra.mxu0 0.0
        %1362 = vmatprep.subr.mxu0 0.0
        %1363 = vmatpush2.xpose.msra.mxu0 0.0
        %1364 = vmatprep.subr.mxu0 0.0
        %1365 = vmatpush2.xpose.msra.mxu0 0.0
        %1366 = vmatprep.subr.mxu0 0.0
        %1367 = vmatpush2.xpose.msra.mxu0 0.0
        %1368 = vmatprep.subr.mxu0 0.0
        %1369 = vmatpush2.xpose.msra.mxu0 0.0
        %1370 = vmatprep.mubr.f32.mxu0 0.0
        %1371 = vmatmul.mubr.f32.gmra.mxu0 %v1301
        %v1372 = vpop.f32.mrf.mxu0
        %v1373 = vadd.f32 0.0, %v1372
        %v1374 = vpop.f32.mrf.mxu0
        %1375 = vdwg.mxu0
        %v1377 = vsel %vm1147, %v1142, 0
        %v1380 = vsel %vm1147, %v1146, 0
        %1382 = vmatprep.subr.mxu0 0.0
        %1383 = vmatpush1.xpose.msra.mxu0 0.0
        %1384 = vmatprep.subr.mxu0 0.0
        %1385 = vmatpush1.xpose.msra.mxu0 0.0
        %1386 = vmatprep.subr.mxu0 0.0
        %1387 = vmatpush1.xpose.msra.mxu0 0.0
        %1388 = vmatprep.subr.mxu0 0.0
        %1389 = vmatpush1.xpose.msra.mxu0 0.0
        %1390 = vmatprep.subr.mxu0 0.0
        %1391 = vmatpush1.xpose.msra.mxu0 0.0
        %1392 = vmatprep.subr.mxu0 0.0
        %1393 = vmatpush1.xpose.msra.mxu0 0.0
        %1394 = vmatprep.subr.mxu0 0.0
        %1395 = vmatpush1.xpose.msra.mxu0 0.0
        %1396 = vmatprep.subr.mxu0 0.0
        %1397 = vmatpush1.xpose.msra.mxu0 0.0
        %1398 = vmatprep.subr.mxu0 0.0
        %1399 = vmatpush1.xpose.msra.mxu0 0.0
        %1400 = vmatprep.subr.mxu0 0.0
        %1401 = vmatpush1.xpose.msra.mxu0 0.0
        %1402 = vmatprep.subr.mxu0 0.0
        %1403 = vmatpush1.xpose.msra.mxu0 0.0
        %1404 = vmatprep.subr.mxu0 0.0
        %1405 = vmatpush1.xpose.msra.mxu0 0.0
        %1406 = vmatprep.subr.mxu0 0.0
        %1407 = vmatpush1.xpose.msra.mxu0 0.0
        %1408 = vmatprep.subr.mxu0 0.0
        %1409 = vmatpush1.xpose.msra.mxu0 0.0
        %1410 = vmatprep.subr.mxu0 0.0
        %1411 = vmatpush1.xpose.msra.mxu0 0.0
        %1412 = vmatprep.subr.mxu0 0.0
        %1413 = vmatpush1.xpose.msra.mxu0 %v1380
        %1414 = vmatprep.subr.mxu0 0.0
        %1415 = vmatpush2.xpose.msra.mxu0 0.0
        %1416 = vmatprep.subr.mxu0 0.0
        %1417 = vmatpush2.xpose.msra.mxu0 0.0
        %1418 = vmatprep.subr.mxu0 0.0
        %1419 = vmatpush2.xpose.msra.mxu0 0.0
        %1420 = vmatprep.subr.mxu0 0.0
        %1421 = vmatpush2.xpose.msra.mxu0 0.0
        %1422 = vmatprep.subr.mxu0 0.0
        %1423 = vmatpush2.xpose.msra.mxu0 0.0
        %1424 = vmatprep.subr.mxu0 0.0
        %1425 = vmatpush2.xpose.msra.mxu0 0.0
        %1426 = vmatprep.subr.mxu0 0.0
        %1427 = vmatpush2.xpose.msra.mxu0 0.0
        %1428 = vmatprep.subr.mxu0 0.0
        %1429 = vmatpush2.xpose.msra.mxu0 0.0
        %1430 = vmatprep.subr.mxu0 0.0
        %1431 = vmatpush2.xpose.msra.mxu0 0.0
        %1432 = vmatprep.subr.mxu0 0.0
        %1433 = vmatpush2.xpose.msra.mxu0 0.0
        %1434 = vmatprep.subr.mxu0 0.0
        %1435 = vmatpush2.xpose.msra.mxu0 0.0
        %1436 = vmatprep.subr.mxu0 0.0
        %1437 = vmatpush2.xpose.msra.mxu0 0.0
        %1438 = vmatprep.subr.mxu0 0.0
        %1439 = vmatpush2.xpose.msra.mxu0 0.0
        %1440 = vmatprep.subr.mxu0 0.0
        %1441 = vmatpush2.xpose.msra.mxu0 0.0
        %1442 = vmatprep.subr.mxu0 0.0
        %1443 = vmatpush2.xpose.msra.mxu0 0.0
        %1444 = vmatprep.subr.mxu0 0.0
        %1445 = vmatpush2.xpose.msra.mxu0 0.0
        %1446 = vmatprep.mubr.f32.mxu0 0.0
        %1447 = vmatmul.mubr.f32.gmra.mxu0 %v1377
        %v1448 = vpop.f32.mrf.mxu0
        %v1449 = vadd.f32 0.0, %v1448
        %v1450 = vpop.f32.mrf.mxu0
        %1451 = vdwg.mxu0
        %v1452 = vlaneseq
        %v1453 = vshrl.u32 %v1452, 7
        %v1454 = vstv %s383
        %v1455 = vadd.s32 %v1454, %v1453
        %v1456 = vlaneseq
        %v1457 = vand.u32 %v1456, 127
        %v1458 = vstv %s385
        %v1459 = vadd.s32 %v1458, %v1457
        %vm1460 = vcmp.ge.s32.totalorder %v1455, %v1459
        %v1461 = vsel %vm1460, 1, 0
        %vm1462 = vcmp.eq.s32.totalorder %v1461, 1
        %v1463 = vsel %vm1462, %v1221, -1e+30
        %v1464 = vsel %vm1462, %v1297, -1e+30
        %v1465 = vsel %vm1462, %v1373, -1e+30
        %v1466 = vsel %vm1462, %v1449, -1e+30
        %v1467 = vld [vmem:[#allocation2] sm:$0xff]
        %v1468 = vld [vmem:[#allocation2 + $0x8] sm:$0xff]
        %v1469 = vld [vmem:[#allocation2 + $0x10] sm:$0xff]
        %v1470 = vld [vmem:[#allocation2 + $0x18] sm:$0xff]
        %v1471 = vsel %vm1147, %v1463, -inf
        %1472 = vmax.xlane.f32.xlu0 %v1471
        %v1473 = vpop.xlane.xlu0 %1472
        %v1474 = vsel %vm1147, %v1464, -inf
        %1475 = vmax.xlane.f32.xlu0 %v1474
        %v1476 = vpop.xlane.xlu0 %1475
        %v1477 = vsel %vm1147, %v1465, -inf
        %1478 = vmax.xlane.f32.xlu0 %v1477
        %v1479 = vpop.xlane.xlu0 %1478
        %v1480 = vsel %vm1147, %v1466, -inf
        %1481 = vmax.xlane.f32.xlu0 %v1480
        %v1482 = vpop.xlane.xlu0 %1481
        %v1483 = vmax.f32 %v1467, %v1473
        %v1484 = vmax.f32 %v1468, %v1476
        %v1485 = vmax.f32 %v1469, %v1479
        %v1486 = vmax.f32 %v1470, %v1482
        %v1487 = vsub.f32 %v1467, %v1483
        %v1488 = vsub.f32 %v1468, %v1484
        %v1489 = vsub.f32 %v1469, %v1485
        %v1490 = vsub.f32 %v1470, %v1486
        %v1491 = vmul.f32 %v1487, 1.442695
        %v1492 = vpow.pop %v1491
        %v1493 = vmul.f32 %v1488, 1.442695
        %v1494 = vpow.pop %v1493
        %v1495 = vmul.f32 %v1489, 1.442695
        %v1496 = vpow.pop %v1495
        %v1497 = vmul.f32 %v1490, 1.442695
        %v1498 = vpow.pop %v1497
        %1500 = vset.pattern.permute.xlu0 0
        %1501 = vperm.xlu0 %1500, %v1483
        %v1502 = vpop.permute.xlu0 %1501
        %1505 = vset.pattern.permute.xlu0 0
        %1506 = vperm.xlu0 %1505, %v1484
        %v1507 = vpop.permute.xlu0 %1506
        %1510 = vset.pattern.permute.xlu0 0
        %1511 = vperm.xlu0 %1510, %v1485
        %v1512 = vpop.permute.xlu0 %1511
        %1515 = vset.pattern.permute.xlu0 0
        %1516 = vperm.xlu0 %1515, %v1486
        %v1517 = vpop.permute.xlu0 %1516
        %v1519 = vsub.f32 %v1463, %v1502
        %v1520 = vsub.f32 %v1464, %v1507
        %v1521 = vsub.f32 %v1465, %v1512
        %v1522 = vsub.f32 %v1466, %v1517
        %v1523 = vmul.f32 %v1519, 1.442695
        %v1524 = vpow.pop %v1523
        %v1525 = vmul.f32 %v1520, 1.442695
        %v1526 = vpow.pop %v1525
        %v1527 = vmul.f32 %v1521, 1.442695
        %v1528 = vpow.pop %v1527
        %v1529 = vmul.f32 %v1522, 1.442695
        %v1530 = vpow.pop %v1529
        %v1531 = vld [vmem:[#allocation3] sm:$0xff]
        %v1532 = vld [vmem:[#allocation3 + $0x8] sm:$0xff]
        %v1533 = vld [vmem:[#allocation3 + $0x10] sm:$0xff]
        %v1534 = vld [vmem:[#allocation3 + $0x18] sm:$0xff]
        %v1535 = vmul.f32 %v1492, %v1531
        %v1536 = vmul.f32 %v1494, %v1532
        %v1537 = vmul.f32 %v1496, %v1533
        %v1538 = vmul.f32 %v1498, %v1534
        %v1539 = vsel %vm1147, %v1524, 0.0
        %1540 = vadd.xlane.f32.xlu0 %v1539
        %v1541 = vpop.xlane.xlu0 %1540
        %v1542 = vsel %vm1147, %v1526, 0.0
        %1543 = vadd.xlane.f32.xlu0 %v1542
        %v1544 = vpop.xlane.xlu0 %1543
        %v1545 = vsel %vm1147, %v1528, 0.0
        %1546 = vadd.xlane.f32.xlu0 %v1545
        %v1547 = vpop.xlane.xlu0 %1546
        %v1548 = vsel %vm1147, %v1530, 0.0
        %1549 = vadd.xlane.f32.xlu0 %v1548
        %v1550 = vpop.xlane.xlu0 %1549
        %v1551 = vadd.f32 %v1535, %v1541
        %v1552 = vadd.f32 %v1536, %v1544
        %v1553 = vadd.f32 %v1537, %v1547
        %v1554 = vadd.f32 %v1538, %v1550
        %vm1555 = vcmask 7168
        %1556 = vst.msk [vmem:[#allocation3] sm:$0xff] %vm1555, %v1551
        %1557 = vst.msk [vmem:[#allocation3 + $0x8] sm:$0xff] %vm1555, %v1552
        %1558 = vst.msk [vmem:[#allocation3 + $0x10] sm:$0xff] %vm1555, %v1553
        %1559 = vst.msk [vmem:[#allocation3 + $0x18] sm:$0xff] %vm1555, %v1554
        %v1560 = vld [vmem:[#allocation4] sm:$0xff]
        %v1561 = vld [vmem:[#allocation4 + $0x8] sm:$0xff]
        %v1562 = vld [vmem:[#allocation4 + $0x10] sm:$0xff]
        %v1563 = vld [vmem:[#allocation4 + $0x18] sm:$0xff]
        %1565 = vset.pattern.permute.xlu0 0
        %1566 = vperm.xlu0 %1565, %v1492
        %v1567 = vpop.permute.xlu0 %1566
        %1570 = vset.pattern.permute.xlu0 0
        %1571 = vperm.xlu0 %1570, %v1494
        %v1572 = vpop.permute.xlu0 %1571
        %1575 = vset.pattern.permute.xlu0 0
        %1576 = vperm.xlu0 %1575, %v1496
        %v1577 = vpop.permute.xlu0 %1576
        %1580 = vset.pattern.permute.xlu0 0
        %1581 = vperm.xlu0 %1580, %v1498
        %v1582 = vpop.permute.xlu0 %1581
        %v1584 = vmul.f32 %v1567, %v1560
        %v1585 = vmul.f32 %v1572, %v1561
        %v1586 = vmul.f32 %v1577, %v1562
        %v1587 = vmul.f32 %v1582, %v1563
        %v1588 = vld [vmem:[%s348] sm:$0xff]
        %v1589 = vld [vmem:[%s348 + $0x8] sm:$0xff]
        %v1590 = vld [vmem:[%s348 + $0x10] sm:$0xff]
        %v1591 = vld [vmem:[%s348 + $0x18] sm:$0xff]
        %v1593 = vsel %vm1147, %v1524, 0
        %1595 = vmatprep.subr.mxu0 0.0
        %1596 = vmatpush1.msra.mxu0 0.0
        %1597 = vmatprep.subr.mxu0 0.0
        %1598 = vmatpush1.msra.mxu0 0.0
        %1599 = vmatprep.subr.mxu0 0.0
        %1600 = vmatpush1.msra.mxu0 0.0
        %1601 = vmatprep.subr.mxu0 0.0
        %1602 = vmatpush1.msra.mxu0 0.0
        %1603 = vmatprep.subr.mxu0 0.0
        %1604 = vmatpush1.msra.mxu0 0.0
        %1605 = vmatprep.subr.mxu0 0.0
        %1606 = vmatpush1.msra.mxu0 0.0
        %1607 = vmatprep.subr.mxu0 0.0
        %1608 = vmatpush1.msra.mxu0 0.0
        %1609 = vmatprep.subr.mxu0 0.0
        %1610 = vmatpush1.msra.mxu0 0.0
        %1611 = vmatprep.subr.mxu0 0.0
        %1612 = vmatpush1.msra.mxu0 0.0
        %1613 = vmatprep.subr.mxu0 0.0
        %1614 = vmatpush1.msra.mxu0 0.0
        %1615 = vmatprep.subr.mxu0 0.0
        %1616 = vmatpush1.msra.mxu0 0.0
        %1617 = vmatprep.subr.mxu0 0.0
        %1618 = vmatpush1.msra.mxu0 0.0
        %1619 = vmatprep.subr.mxu0 0.0
        %1620 = vmatpush1.msra.mxu0 0.0
        %1621 = vmatprep.subr.mxu0 0.0
        %1622 = vmatpush1.msra.mxu0 0.0
        %1623 = vmatprep.subr.mxu0 0.0
        %1624 = vmatpush1.msra.mxu0 0.0
        %1625 = vmatprep.subr.mxu0 0.0
        %1626 = vmatpush1.msra.mxu0 %v1588
        %1627 = vmatprep.subr.mxu0 0.0
        %1628 = vmatpush2.msra.mxu0 0.0
        %1629 = vmatprep.subr.mxu0 0.0
        %1630 = vmatpush2.msra.mxu0 0.0
        %1631 = vmatprep.subr.mxu0 0.0
        %1632 = vmatpush2.msra.mxu0 0.0
        %1633 = vmatprep.subr.mxu0 0.0
        %1634 = vmatpush2.msra.mxu0 0.0
        %1635 = vmatprep.subr.mxu0 0.0
        %1636 = vmatpush2.msra.mxu0 0.0
        %1637 = vmatprep.subr.mxu0 0.0
        %1638 = vmatpush2.msra.mxu0 0.0
        %1639 = vmatprep.subr.mxu0 0.0
        %1640 = vmatpush2.msra.mxu0 0.0
        %1641 = vmatprep.subr.mxu0 0.0
        %1642 = vmatpush2.msra.mxu0 0.0
        %1643 = vmatprep.subr.mxu0 0.0
        %1644 = vmatpush2.msra.mxu0 0.0
        %1645 = vmatprep.subr.mxu0 0.0
        %1646 = vmatpush2.msra.mxu0 0.0
        %1647 = vmatprep.subr.mxu0 0.0
        %1648 = vmatpush2.msra.mxu0 0.0
        %1649 = vmatprep.subr.mxu0 0.0
        %1650 = vmatpush2.msra.mxu0 0.0
        %1651 = vmatprep.subr.mxu0 0.0
        %1652 = vmatpush2.msra.mxu0 0.0
        %1653 = vmatprep.subr.mxu0 0.0
        %1654 = vmatpush2.msra.mxu0 0.0
        %1655 = vmatprep.subr.mxu0 0.0
        %1656 = vmatpush2.msra.mxu0 0.0
        %1657 = vmatprep.subr.mxu0 0.0
        %1658 = vmatpush2.msra.mxu0 0.0
        %1659 = vmatprep.mubr.f32.mxu0 0.0
        %1660 = vmatmul.mubr.f32.gmra.mxu0 %v1593
        %v1661 = vpop.f32.mrf.mxu0
        %v1662 = vadd.f32 0.0, %v1661
        %v1663 = vpop.f32.mrf.mxu0
        %1664 = vdwg.mxu0
        %v1666 = vsel %vm1147, %v1526, 0
        %1668 = vmatprep.subr.mxu0 0.0
        %1669 = vmatpush1.msra.mxu0 0.0
        %1670 = vmatprep.subr.mxu0 0.0
        %1671 = vmatpush1.msra.mxu0 0.0
        %1672 = vmatprep.subr.mxu0 0.0
        %1673 = vmatpush1.msra.mxu0 0.0
        %1674 = vmatprep.subr.mxu0 0.0
        %1675 = vmatpush1.msra.mxu0 0.0
        %1676 = vmatprep.subr.mxu0 0.0
        %1677 = vmatpush1.msra.mxu0 0.0
        %1678 = vmatprep.subr.mxu0 0.0
        %1679 = vmatpush1.msra.mxu0 0.0
        %1680 = vmatprep.subr.mxu0 0.0
        %1681 = vmatpush1.msra.mxu0 0.0
        %1682 = vmatprep.subr.mxu0 0.0
        %1683 = vmatpush1.msra.mxu0 0.0
        %1684 = vmatprep.subr.mxu0 0.0
        %1685 = vmatpush1.msra.mxu0 0.0
        %1686 = vmatprep.subr.mxu0 0.0
        %1687 = vmatpush1.msra.mxu0 0.0
        %1688 = vmatprep.subr.mxu0 0.0
        %1689 = vmatpush1.msra.mxu0 0.0
        %1690 = vmatprep.subr.mxu0 0.0
        %1691 = vmatpush1.msra.mxu0 0.0
        %1692 = vmatprep.subr.mxu0 0.0
        %1693 = vmatpush1.msra.mxu0 0.0
        %1694 = vmatprep.subr.mxu0 0.0
        %1695 = vmatpush1.msra.mxu0 0.0
        %1696 = vmatprep.subr.mxu0 0.0
        %1697 = vmatpush1.msra.mxu0 0.0
        %1698 = vmatprep.subr.mxu0 0.0
        %1699 = vmatpush1.msra.mxu0 %v1589
        %1700 = vmatprep.subr.mxu0 0.0
        %1701 = vmatpush2.msra.mxu0 0.0
        %1702 = vmatprep.subr.mxu0 0.0
        %1703 = vmatpush2.msra.mxu0 0.0
        %1704 = vmatprep.subr.mxu0 0.0
        %1705 = vmatpush2.msra.mxu0 0.0
        %1706 = vmatprep.subr.mxu0 0.0
        %1707 = vmatpush2.msra.mxu0 0.0
        %1708 = vmatprep.subr.mxu0 0.0
        %1709 = vmatpush2.msra.mxu0 0.0
        %1710 = vmatprep.subr.mxu0 0.0
        %1711 = vmatpush2.msra.mxu0 0.0
        %1712 = vmatprep.subr.mxu0 0.0
        %1713 = vmatpush2.msra.mxu0 0.0
        %1714 = vmatprep.subr.mxu0 0.0
        %1715 = vmatpush2.msra.mxu0 0.0
        %1716 = vmatprep.subr.mxu0 0.0
        %1717 = vmatpush2.msra.mxu0 0.0
        %1718 = vmatprep.subr.mxu0 0.0
        %1719 = vmatpush2.msra.mxu0 0.0
        %1720 = vmatprep.subr.mxu0 0.0
        %1721 = vmatpush2.msra.mxu0 0.0
        %1722 = vmatprep.subr.mxu0 0.0
        %1723 = vmatpush2.msra.mxu0 0.0
        %1724 = vmatprep.subr.mxu0 0.0
        %1725 = vmatpush2.msra.mxu0 0.0
        %1726 = vmatprep.subr.mxu0 0.0
        %1727 = vmatpush2.msra.mxu0 0.0
        %1728 = vmatprep.subr.mxu0 0.0
        %1729 = vmatpush2.msra.mxu0 0.0
        %1730 = vmatprep.subr.mxu0 0.0
        %1731 = vmatpush2.msra.mxu0 0.0
        %1732 = vmatprep.mubr.f32.mxu0 0.0
        %1733 = vmatmul.mubr.f32.gmra.mxu0 %v1666
        %v1734 = vpop.f32.mrf.mxu0
        %v1735 = vadd.f32 0.0, %v1734
        %v1736 = vpop.f32.mrf.mxu0
        %1737 = vdwg.mxu0
        %v1739 = vsel %vm1147, %v1528, 0
        %1741 = vmatprep.subr.mxu0 0.0
        %1742 = vmatpush1.msra.mxu0 0.0
        %1743 = vmatprep.subr.mxu0 0.0
        %1744 = vmatpush1.msra.mxu0 0.0
        %1745 = vmatprep.subr.mxu0 0.0
        %1746 = vmatpush1.msra.mxu0 0.0
        %1747 = vmatprep.subr.mxu0 0.0
        %1748 = vmatpush1.msra.mxu0 0.0
        %1749 = vmatprep.subr.mxu0 0.0
        %1750 = vmatpush1.msra.mxu0 0.0
        %1751 = vmatprep.subr.mxu0 0.0
        %1752 = vmatpush1.msra.mxu0 0.0
        %1753 = vmatprep.subr.mxu0 0.0
        %1754 = vmatpush1.msra.mxu0 0.0
        %1755 = vmatprep.subr.mxu0 0.0
        %1756 = vmatpush1.msra.mxu0 0.0
        %1757 = vmatprep.subr.mxu0 0.0
        %1758 = vmatpush1.msra.mxu0 0.0
        %1759 = vmatprep.subr.mxu0 0.0
        %1760 = vmatpush1.msra.mxu0 0.0
        %1761 = vmatprep.subr.mxu0 0.0
        %1762 = vmatpush1.msra.mxu0 0.0
        %1763 = vmatprep.subr.mxu0 0.0
        %1764 = vmatpush1.msra.mxu0 0.0
        %1765 = vmatprep.subr.mxu0 0.0
        %1766 = vmatpush1.msra.mxu0 0.0
        %1767 = vmatprep.subr.mxu0 0.0
        %1768 = vmatpush1.msra.mxu0 0.0
        %1769 = vmatprep.subr.mxu0 0.0
        %1770 = vmatpush1.msra.mxu0 0.0
        %1771 = vmatprep.subr.mxu0 0.0
        %1772 = vmatpush1.msra.mxu0 %v1590
        %1773 = vmatprep.subr.mxu0 0.0
        %1774 = vmatpush2.msra.mxu0 0.0
        %1775 = vmatprep.subr.mxu0 0.0
        %1776 = vmatpush2.msra.mxu0 0.0
        %1777 = vmatprep.subr.mxu0 0.0
        %1778 = vmatpush2.msra.mxu0 0.0
        %1779 = vmatprep.subr.mxu0 0.0
        %1780 = vmatpush2.msra.mxu0 0.0
        %1781 = vmatprep.subr.mxu0 0.0
        %1782 = vmatpush2.msra.mxu0 0.0
        %1783 = vmatprep.subr.mxu0 0.0
        %1784 = vmatpush2.msra.mxu0 0.0
        %1785 = vmatprep.subr.mxu0 0.0
        %1786 = vmatpush2.msra.mxu0 0.0
        %1787 = vmatprep.subr.mxu0 0.0
        %1788 = vmatpush2.msra.mxu0 0.0
        %1789 = vmatprep.subr.mxu0 0.0
        %1790 = vmatpush2.msra.mxu0 0.0
        %1791 = vmatprep.subr.mxu0 0.0
        %1792 = vmatpush2.msra.mxu0 0.0
        %1793 = vmatprep.subr.mxu0 0.0
        %1794 = vmatpush2.msra.mxu0 0.0
        %1795 = vmatprep.subr.mxu0 0.0
        %1796 = vmatpush2.msra.mxu0 0.0
        %1797 = vmatprep.subr.mxu0 0.0
        %1798 = vmatpush2.msra.mxu0 0.0
        %1799 = vmatprep.subr.mxu0 0.0
        %1800 = vmatpush2.msra.mxu0 0.0
        %1801 = vmatprep.subr.mxu0 0.0
        %1802 = vmatpush2.msra.mxu0 0.0
        %1803 = vmatprep.subr.mxu0 0.0
        %1804 = vmatpush2.msra.mxu0 0.0
        %1805 = vmatprep.mubr.f32.mxu0 0.0
        %1806 = vmatmul.mubr.f32.gmra.mxu0 %v1739
        %v1807 = vpop.f32.mrf.mxu0
        %v1808 = vadd.f32 0.0, %v1807
        %v1809 = vpop.f32.mrf.mxu0
        %1810 = vdwg.mxu0
        %v1812 = vsel %vm1147, %v1530, 0
        %1814 = vmatprep.subr.mxu0 0.0
        %1815 = vmatpush1.msra.mxu0 0.0
        %1816 = vmatprep.subr.mxu0 0.0
        %1817 = vmatpush1.msra.mxu0 0.0
        %1818 = vmatprep.subr.mxu0 0.0
        %1819 = vmatpush1.msra.mxu0 0.0
        %1820 = vmatprep.subr.mxu0 0.0
        %1821 = vmatpush1.msra.mxu0 0.0
        %1822 = vmatprep.subr.mxu0 0.0
        %1823 = vmatpush1.msra.mxu0 0.0
        %1824 = vmatprep.subr.mxu0 0.0
        %1825 = vmatpush1.msra.mxu0 0.0
        %1826 = vmatprep.subr.mxu0 0.0
        %1827 = vmatpush1.msra.mxu0 0.0
        %1828 = vmatprep.subr.mxu0 0.0
        %1829 = vmatpush1.msra.mxu0 0.0
        %1830 = vmatprep.subr.mxu0 0.0
        %1831 = vmatpush1.msra.mxu0 0.0
        %1832 = vmatprep.subr.mxu0 0.0
        %1833 = vmatpush1.msra.mxu0 0.0
        %1834 = vmatprep.subr.mxu0 0.0
        %1835 = vmatpush1.msra.mxu0 0.0
        %1836 = vmatprep.subr.mxu0 0.0
        %1837 = vmatpush1.msra.mxu0 0.0
        %1838 = vmatprep.subr.mxu0 0.0
        %1839 = vmatpush1.msra.mxu0 0.0
        %1840 = vmatprep.subr.mxu0 0.0
        %1841 = vmatpush1.msra.mxu0 0.0
        %1842 = vmatprep.subr.mxu0 0.0
        %1843 = vmatpush1.msra.mxu0 0.0
        %1844 = vmatprep.subr.mxu0 0.0
        %1845 = vmatpush1.msra.mxu0 %v1591
        %1846 = vmatprep.subr.mxu0 0.0
        %1847 = vmatpush2.msra.mxu0 0.0
        %1848 = vmatprep.subr.mxu0 0.0
        %1849 = vmatpush2.msra.mxu0 0.0
        %1850 = vmatprep.subr.mxu0 0.0
        %1851 = vmatpush2.msra.mxu0 0.0
        %1852 = vmatprep.subr.mxu0 0.0
        %1853 = vmatpush2.msra.mxu0 0.0
        %1854 = vmatprep.subr.mxu0 0.0
        %1855 = vmatpush2.msra.mxu0 0.0
        %1856 = vmatprep.subr.mxu0 0.0
        %1857 = vmatpush2.msra.mxu0 0.0
        %1858 = vmatprep.subr.mxu0 0.0
        %1859 = vmatpush2.msra.mxu0 0.0
        %1860 = vmatprep.subr.mxu0 0.0
        %1861 = vmatpush2.msra.mxu0 0.0
        %1862 = vmatprep.subr.mxu0 0.0
        %1863 = vmatpush2.msra.mxu0 0.0
        %1864 = vmatprep.subr.mxu0 0.0
        %1865 = vmatpush2.msra.mxu0 0.0
        %1866 = vmatprep.subr.mxu0 0.0
        %1867 = vmatpush2.msra.mxu0 0.0
        %1868 = vmatprep.subr.mxu0 0.0
        %1869 = vmatpush2.msra.mxu0 0.0
        %1870 = vmatprep.subr.mxu0 0.0
        %1871 = vmatpush2.msra.mxu0 0.0
        %1872 = vmatprep.subr.mxu0 0.0
        %1873 = vmatpush2.msra.mxu0 0.0
        %1874 = vmatprep.subr.mxu0 0.0
        %1875 = vmatpush2.msra.mxu0 0.0
        %1876 = vmatprep.subr.mxu0 0.0
        %1877 = vmatpush2.msra.mxu0 0.0
        %1878 = vmatprep.mubr.f32.mxu0 0.0
        %1879 = vmatmul.mubr.f32.gmra.mxu0 %v1812
        %v1880 = vpop.f32.mrf.mxu0
        %v1881 = vadd.f32 0.0, %v1880
        %v1882 = vpop.f32.mrf.mxu0
        %1883 = vdwg.mxu0
        %v1884 = vadd.f32 %v1584, %v1662
        %v1885 = vadd.f32 %v1585, %v1735
        %v1886 = vadd.f32 %v1586, %v1808
        %v1887 = vadd.f32 %v1587, %v1881
        %1888 = vst.msk [vmem:[#allocation4] sm:$0xff] %vm1147, %v1884
        %1889 = vst.msk [vmem:[#allocation4 + $0x8] sm:$0xff] %vm1147, %v1885
        %1890 = vst.msk [vmem:[#allocation4 + $0x10] sm:$0xff] %vm1147, %v1886
        %1891 = vst.msk [vmem:[#allocation4 + $0x18] sm:$0xff] %vm1147, %v1887
        %1892 = vst.msk [vmem:[#allocation2] sm:$0xff] %vm1555, %v1483
        %1893 = vst.msk [vmem:[#allocation2 + $0x8] sm:$0xff] %vm1555, %v1484
        %1894 = vst.msk [vmem:[#allocation2 + $0x10] sm:$0xff] %vm1555, %v1485
        %1895 = vst.msk [vmem:[#allocation2 + $0x18] sm:$0xff] %vm1555, %v1486
      $region44: #{_causal_self_attention.4} parent=31 // pred_fallthru
        _
      // Predicated region
      $region45: #{_causal_self_attention.4} parent=31 // pred_check
        %p1896 = pneg %p365
      $region46: #{_causal_self_attention.4} parent=31 // pred_check_branch
        %1898 = sbr.rel (%p1896) target = $region48
      $region47: #{_causal_self_attention.4} parent=31 // pred_region
        %v1899 = vld [vmem:[#allocation4] sm:$0xff]
        %v1900 = vld [vmem:[#allocation4 + $0x8] sm:$0xff]
        %v1901 = vld [vmem:[#allocation4 + $0x10] sm:$0xff]
        %v1902 = vld [vmem:[#allocation4 + $0x18] sm:$0xff]
        %v1903 = vld [vmem:[#allocation3] sm:$0xff]
        %v1904 = vld [vmem:[#allocation3 + $0x8] sm:$0xff]
        %v1905 = vld [vmem:[#allocation3 + $0x10] sm:$0xff]
        %v1906 = vld [vmem:[#allocation3 + $0x18] sm:$0xff]
        %v1907 = vrcp.pop %v1903
        %v1908 = vrcp.pop %v1904
        %v1909 = vrcp.pop %v1905
        %v1910 = vrcp.pop %v1906
        %1912 = vset.pattern.permute.xlu0 0
        %1913 = vperm.xlu0 %1912, %v1907
        %v1914 = vpop.permute.xlu0 %1913
        %1917 = vset.pattern.permute.xlu0 0
        %1918 = vperm.xlu0 %1917, %v1908
        %v1919 = vpop.permute.xlu0 %1918
        %1922 = vset.pattern.permute.xlu0 0
        %1923 = vperm.xlu0 %1922, %v1909
        %v1924 = vpop.permute.xlu0 %1923
        %1927 = vset.pattern.permute.xlu0 0
        %1928 = vperm.xlu0 %1927, %v1910
        %v1929 = vpop.permute.xlu0 %1928
        %v1931 = vmul.f32 %v1899, %v1914
        %v1932 = vmul.f32 %v1900, %v1919
        %v1933 = vmul.f32 %v1901, %v1924
        %v1934 = vmul.f32 %v1902, %v1929
        %vm1935 = vcmask 64512
        %1936 = vst.msk [vmem:[%s363] sm:$0xff] %vm1935, %v1931
        %1937 = vst.msk [vmem:[%s363 + $0x8] sm:$0xff] %vm1935, %v1932
        %1938 = vst.msk [vmem:[%s363 + $0x10] sm:$0xff] %vm1935, %v1933
        %1939 = vst.msk [vmem:[%s363 + $0x18] sm:$0xff] %vm1935, %v1934
      $region48: #{_causal_self_attention.4} parent=31 // pred_fallthru
        _
      %s1940 = smul.u32 4, %s21
      %p1941 = scmp.lt.s32.totalorder %s20, 1
      %s1942 = scalar_select %p1941, %s20, 1
      %p1943 = scmp.lt.s32.totalorder %s1940, 3
      %s1944 = scalar_select %p1943, %s1940, 3
      %p1945 = scmp.lt.s32.totalorder %s22, 0
      %s1946 = scalar_select %p1945, %s22, 0
      %s1947 = sadd.s32 %s1946, %s1944
      %s1948 = smul.addr %s1942, 4
      %s1949 = sadd.s32 %s1947, %s1948
      %s1950 = smul.addr %s1949, 8
      %s1951 = scalar_lea.vmem %s3, %s1950
      // Predicated region
      $region49: #{_causal_self_attention.4} parent=31 // pred_check
        %p1952 = pneg %p160
      $region50: #{_causal_self_attention.4} parent=31 // pred_check_branch
        %1954 = sbr.rel (%p1952) target = $region52
      $region51: #{_causal_self_attention.4} parent=31 // pred_region
        %s1955 = smul.u32 4, %s21
      $region52: #{_causal_self_attention.4} parent=31 // pred_fallthru
        _
    $region32: #{_causal_self_attention.4} parent=5 // pred_fallthru
      _
    %p1956 = scmp.le.s32.totalorder 2, %s9
    // Predicated region
    $region53: #{_causal_self_attention.4} parent=5 // pred_check
      %p1957 = pneg %p1956
    $region54: #{_causal_self_attention.4} parent=5 // pred_check_branch
      %1959 = sbr.rel (%p1957) target = $region56
    $region55: #{_causal_self_attention.4} parent=5 // pred_region
      %s1960 = ssub.s32 %s9, 2
      // Predicated region
      $region57: #{_causal_self_attention.4} parent=55 // pred_check
        %p1961 = pneg %p166
      $region58: #{_causal_self_attention.4} parent=55 // pred_check_branch
        %1963 = sbr.rel (%p1961) target = $region60
      $region59: #{_causal_self_attention.4} parent=55 // pred_region
        %s1964 = smul.u32 4, %s25
        %p1965 = scmp.lt.s32.totalorder %s24, 1
        %s1966 = scalar_select %p1965, %s24, 1
        %p1967 = scmp.lt.s32.totalorder %s1964, 3
        %s1968 = scalar_select %p1967, %s1964, 3
        %p1969 = scmp.lt.s32.totalorder %s26, 0
        %s1970 = scalar_select %p1969, %s26, 0
        %s1971 = sadd.s32 %s1970, %s1968
        %s1972 = smul.addr %s1966, 4
        %s1973 = sadd.s32 %s1971, %s1972
        %s1974 = smul.addr %s1973, 8
        %s1975 = scalar_lea.vmem %s3, %s1974
      $region60: #{_causal_self_attention.4} parent=55 // pred_fallthru
        _
    $region56: #{_causal_self_attention.4} parent=5 // pred_fallthru
      _
  $region6: #{_causal_self_attention.4} parent=0 // loop_footer
    %s13 = sadd.s32 1, %s9
  $region7: #{_causal_self_attention.4} parent=0 // loop_footer_branch
    %8 = sbr.rel target = $region3
  $region8: #{_causal_self_attention.4} parent=0 // loop_exit
    _

</llo_original>
